<compile_context>
chip_gen: v5e
topology: v5e:2x2
jax: 0.10.0
libtpu: 0.0.40
codegen_flags: <defaults>
</compile_context>

<pallas_src>
import functools

import jax
import jax.numpy as jnp
from jax.experimental import pallas as pl
from jax.experimental.pallas import tpu as pltpu

NEG_MASK = -1e30  # folded into the logits bias for padded output lanes


def _round_up(x, m):
    return ((x + m - 1) // m) * m


# --------------------------------------------------------------------------- #
# Pass 1: recurrence. grid = (batch_blocks, time_chunks); time is "arbitrary". #
# --------------------------------------------------------------------------- #
def gru_recurrent_kernel(xg_ref, wh_ref, bhc_ref, h0_ref, hseq_ref, h_scr, *, ph, tc):
    """One grid step == Tc timesteps for one batch block.

    xg_ref   : (Tc, Bb, 3Ph) x-side gate projections (+biases): [r | z | cand]
    wh_ref   : (Ph, 3Ph)     fused h-side weights, same segment layout (resident)
    bhc_ref  : (1, Ph)       h2c bias (multiplied by rg, cannot fold into x-side)
    h0_ref   : (Bb, Ph)      initial hidden state for this batch block (resident)
    hseq_ref : (Tc, Bb, Ph)  per-timestep NEW hidden states (output)
    h_scr    : (Bb, Ph)      running hidden state, persists across time chunks
    """
    @pl.when(pl.program_id(1) == 0)
    def _():
        h_scr[...] = h0_ref[...]

    wh = wh_ref[...]
    bhc = bhc_ref[...]

    def step(i, h):
        xp = xg_ref[i]                                                    # (Bb, 3Ph)
        hp = jnp.dot(h, wh, preferred_element_type=jnp.float32)          # (Bb, 3Ph)
        # One fused EUP push for both gates, then lane-aligned slices.
        gates = jax.nn.sigmoid(xp[:, : 2 * ph] + hp[:, : 2 * ph])
        rg = gates[:, :ph]
        zg = gates[:, ph:]
        h_cand = jnp.tanh(xp[:, 2 * ph:] + rg * (hp[:, 2 * ph:] + bhc))
        h_new = (1.0 - zg) * h_cand + zg * h
        hseq_ref[i] = h_new
        return h_new

    h_final = jax.lax.fori_loop(0, tc, step, h_scr[...], unroll=True)
    h_scr[...] = h_final


# --------------------------------------------------------------------------- #
# Pass 2: output head (fully parallel over all T*B rows).                      #
# --------------------------------------------------------------------------- #
def gru_head_kernel(hprev_ref, wo_ref, xo_ref, out_ref):
    """logits = h_prev @ Wo_h + (x@Wo_x + bo[-1e30 on padded lanes]); log-softmax."""
    logits = jnp.dot(hprev_ref[...], wo_ref[...],
                     preferred_element_type=jnp.float32) + xo_ref[...]
    m = jnp.max(logits, axis=1, keepdims=True)
    shifted = logits - m
    lse = jnp.log(jnp.sum(jnp.exp(shifted), axis=1, keepdims=True))
    out_ref[...] = shifted - lse


@jax.jit
def gru_sequence(line, h0, params):
    """Run the GRU cell over a whole sequence.

    line: (T, B, I), h0: (B, H).
    Returns (log_probs (T, B, O), h_final (B, H)).
    """
    T, B, I = line.shape
    H = h0.shape[1]
    O = params["wo"].shape[0]

    # Decoupled segment widths: gates padded to Ph lanes, logits to Po lanes.
    Ph = _round_up(H, 128)
    Po = _round_up(O, 128)
    Bp = _round_up(B, 8)

    # Batch block: split in two when possible so v7x megacore can run the two
    # halves of the (independent-per-row) recurrence on separate TensorCores.
    Bb = Bp // 2 if (Bp % 16 == 0) else Bp
    nb = Bp // Bb

    # Timestep chunk: amortize per-grid-step pipeline overhead; bound so the
    # double-buffered xg/hseq chunks stay far below v7x's 64 MiB VMEM.
    bytes_per_step = Bb * (3 * Ph + Ph) * 4 * 2          # in + out, f32, x2 buffers
    Tc = max(1, min(T, 32, (8 * 1024 * 1024) // max(bytes_per_step, 1)))
    Tp = _round_up(T, Tc)
    nt = Tp // Tc

    # ---- one-time parameter prep (PyTorch (out,in) -> (in,out), split halves) ----
    wg, wo = params["wg"], params["wo"]
    wg_x, wg_h = wg[:, :I].T, wg[:, I:].T            # (I,2H), (H,2H)
    wo_x, wo_h = wo[:, :I].T, wo[:, I:].T            # (I,O),  (H,O)
    wic, whc = params["wic"].T, params["whc"].T      # (I,H),  (H,H)
    bg, bic, bhc, bo = params["bg"], params["bic"], params["bhc"], params["bo"]

    def padc(w, width):  # zero-pad columns to `width` lanes
        return jnp.pad(w, ((0, 0), (0, width - w.shape[1])))

    # x-side fused weights / bias: [r | z | cand] (Ph each) + [logits] (Po).
    Wx_full = jnp.concatenate(
        [padc(wg_x[:, :H], Ph), padc(wg_x[:, H:], Ph), padc(wic, Ph), padc(wo_x, Po)],
        axis=1)                                                       # (I, 3Ph+Po)
    bx_full = jnp.concatenate([
        jnp.pad(bg[:H], (0, Ph - H)),
        jnp.pad(bg[H:], (0, Ph - H)),
        jnp.pad(bic, (0, Ph - H)),
        jnp.pad(bo, (0, Po - O), constant_values=NEG_MASK),           # mask folded in
    ]).reshape(1, 3 * Ph + Po)

    # h-side fused gate weights (Ph, 3Ph); padded rows/cols are zero so padded
    # hidden lanes stay exactly 0 through the recurrence.
    Wh_gates = jnp.concatenate(
        [padc(wg_h[:, :H], Ph), padc(wg_h[:, H:], Ph), padc(whc, Ph)], axis=1)
    Wh_gates = jnp.pad(Wh_gates, ((0, Ph - H), (0, 0)))               # (Ph, 3Ph)
    Wo_h_p = jnp.pad(padc(wo_h, Po), ((0, Ph - H), (0, 0)))           # (Ph, Po)
    bhc_p = jnp.pad(bhc, (0, Ph - H)).reshape(1, Ph)

    # ---- hoist all x-side projections: one big MXU matmul in the wrapper ----
    line_p = jnp.pad(line, ((0, 0), (0, Bp - B), (0, 0)))             # (T, Bp, I)
    xall = jnp.dot(line_p.reshape(T * Bp, I), Wx_full,
                   precision=jax.lax.Precision.HIGHEST) + bx_full
    xall = xall.astype(jnp.float32)
    xg = xall[:, : 3 * Ph].reshape(T, Bp, 3 * Ph)                     # gate projections
    xo = xall[:, 3 * Ph:]                                             # (T*Bp, Po) logits side

    if Tp > T:
        xg = jnp.pad(xg, ((0, Tp - T), (0, 0), (0, 0)))

    h0_p = jnp.pad(h0, ((0, Bp - B), (0, Ph - H))).astype(jnp.float32)

    # ---------------- Pass 1: serial recurrence over time chunks ----------------
    rec_kernel = functools.partial(gru_recurrent_kernel, ph=Ph, tc=Tc)
    h_all = pl.pallas_call(
        rec_kernel,
        out_shape=jax.ShapeDtypeStruct((Tp, Bp, Ph), jnp.float32),
        grid=(nb, nt),
        in_specs=[
            pl.BlockSpec((Tc, Bb, 3 * Ph), lambda b, c: (c, b, 0)),   # x-side gate chunk
            pl.BlockSpec((Ph, 3 * Ph), lambda b, c: (0, 0)),          # fused h-side weights
            pl.BlockSpec((1, Ph), lambda b, c: (0, 0)),               # h2c bias
            pl.BlockSpec((Bb, Ph), lambda b, c: (b, 0)),              # initial hidden
        ],
        out_specs=pl.BlockSpec((Tc, Bb, Ph), lambda b, c: (c, b, 0)), # per-step hidden
        scratch_shapes=[pltpu.VMEM((Bb, Ph), jnp.float32)],           # running hidden
        compiler_params=pltpu.CompilerParams(
            dimension_semantics=("parallel", "arbitrary"),
            vmem_limit_bytes=32 * 1024 * 1024,
        ),
    )(xg, Wh_gates, bhc_p, h0_p)

    # ---------------- Pass 2: parallel output head over all rows ----------------
    # Output at step t uses the PRE-update hidden h_{t-1} (h_{-1} = h0).
    h_prev = jnp.concatenate([h0_p[None], h_all[:T - 1]], axis=0)     # (T, Bp, Ph)
    h_prev_flat = h_prev.reshape(T * Bp, Ph)

    rows = T * Bp
    R = min(_round_up(rows, 8), 512)
    Rp = _round_up(rows, R)
    if Rp > rows:
        h_prev_flat = jnp.pad(h_prev_flat, ((0, Rp - rows), (0, 0)))
        xo = jnp.pad(xo, ((0, Rp - rows), (0, 0)))

    out_flat = pl.pallas_call(
        gru_head_kernel,
        out_shape=jax.ShapeDtypeStruct((Rp, Po), jnp.float32),
        grid=(Rp // R,),
        in_specs=[
            pl.BlockSpec((R, Ph), lambda r: (r, 0)),
            pl.BlockSpec((Ph, Po), lambda r: (0, 0)),
            pl.BlockSpec((R, Po), lambda r: (r, 0)),
        ],
        out_specs=pl.BlockSpec((R, Po), lambda r: (r, 0)),
        compiler_params=pltpu.CompilerParams(
            dimension_semantics=("parallel",),
            vmem_limit_bytes=32 * 1024 * 1024,
        ),
    )(h_prev_flat, Wo_h_p, xo)

    out = out_flat[:rows].reshape(T, Bp, Po)[:, :B, :O]
    h_final = h_all[T - 1, :B, :H]
    return out, h_final


def init_params(key, input_size, hidden_size, output_size):
    """PyTorch nn.Linear default init: U(-k, k), k = 1/sqrt(fan_in)."""
    gate_size = 2 * hidden_size

    def linear(k, out_f, in_f):
        kw, kb = jax.random.split(k)
        bound = 1.0 / jnp.sqrt(in_f)
        w = jax.random.uniform(kw, (out_f, in_f), jnp.float32, -bound, bound)
        b = jax.random.uniform(kb, (out_f,), jnp.float32, -bound, bound)
        return w, b

    k1, k2, k3, k4 = jax.random.split(key, 4)
    wg, bg = linear(k1, gate_size, input_size + hidden_size)    # i2g
    wic, bic = linear(k2, hidden_size, input_size)              # i2c
    whc, bhc = linear(k3, hidden_size, hidden_size)             # h2c
    wo, bo = linear(k4, output_size, input_size + hidden_size)  # i2o
    return dict(wg=wg, bg=bg, wic=wic, bic=bic, whc=whc, bhc=bhc, wo=wo, bo=bo)


def gru_cell_ref(x, h, params):
    """Pure-JAX single-step reference."""
    H = h.shape[1]
    combined = jnp.concatenate([x, h], axis=1)
    g2 = combined @ params["wg"].T + params["bg"]
    rg = jax.nn.sigmoid(g2[:, :H])
    zg = jax.nn.sigmoid(g2[:, H:])
    ic = x @ params["wic"].T + params["bic"]
    hc = h @ params["whc"].T + params["bhc"]
    h_cand = jnp.tanh(ic + rg * hc)
    h_new = (1.0 - zg) * h_cand + zg * h
    logits = combined @ params["wo"].T + params["bo"]
    return jax.nn.log_softmax(logits, axis=1), h_new


if __name__ == "__main__":
    key = jax.random.PRNGKey(0)
    kp, kx = jax.random.split(key)

    batch, input_size, hidden_size, output_size = 4, 16, 32, 8
    seq_len = 8

    params = init_params(kp, input_size, hidden_size, output_size)
    line = jax.random.normal(kx, (seq_len, batch, input_size), jnp.float32)
    hidden0 = jnp.zeros((batch, hidden_size), jnp.float32)

    # Fused Pallas path (mirrors GRU.test's per-step loop).
    out_all, hidden_final = gru_sequence(line, hidden0, params)
    out_all = jax.block_until_ready(out_all)
    hidden_final = jax.block_until_ready(hidden_final)

    # Pure-JAX reference loop.
    h_ref = hidden0
    outs_ref = []
    for t in range(seq_len):
        o_ref, h_ref = gru_cell_ref(line[t], h_ref, params)
        outs_ref.append(o_ref)
    outs_ref = jnp.stack(outs_ref, axis=0)

    assert out_all.shape == (seq_len, batch, output_size)
    assert hidden_final.shape == (batch, hidden_size)
    assert jnp.allclose(out_all, outs_ref, atol=1e-3, rtol=1e-3)
    assert jnp.allclose(hidden_final, h_ref, atol=1e-3, rtol=1e-3)
    print("KERNEL_OK")
</pallas_src>

<mosaic_0001>
module attributes {stable_mosaic.version = 11 : i64} {
  func.func @gru_recurrent_kernel(%arg0: i32, %arg1: i32, %arg2: memref<8x8x384xf32, #tpu.memory_space<vmem>>, %arg3: memref<128x384xf32, #tpu.memory_space<vmem>>, %arg4: memref<1x128xf32, #tpu.memory_space<vmem>>, %arg5: memref<8x128xf32, #tpu.memory_space<vmem>>, %arg6: memref<8x8x128xf32, #tpu.memory_space<vmem>>, %arg7: memref<8x128xf32, #tpu.memory_space<vmem>>) attributes {dimension_semantics = [#tpu.dimension_semantics<parallel>, #tpu.dimension_semantics<arbitrary>], iteration_bounds = array<i64: 1, 1>, scalar_prefetch = 0 : i64, scratch_operands = 1 : i64, tpu.core_type = #tpu.core_type<tc>, window_params = [{transform_indices = @transform_0, window_bounds = array<i64: 8, 8, 384>}, {pipeline_mode = #tpu.pipeline_mode<synchronous>, transform_indices = @transform_1, window_bounds = array<i64: 128, 384>}, {pipeline_mode = #tpu.pipeline_mode<synchronous>, transform_indices = @transform_2, window_bounds = array<i64: 1, 128>}, {transform_indices = @transform_3, window_bounds = array<i64: 8, 128>}, {transform_indices = @transform_4, window_bounds = array<i64: 8, 8, 128>}]} {
    %c0_i32 = arith.constant 0 : i32
    %0 = arith.cmpi eq, %arg1, %c0_i32 : i32
    %1 = arith.extui %0 : i1 to i32
    %c0_i32_0 = arith.constant 0 : i32
    %2 = arith.cmpi ne, %1, %c0_i32_0 : i32
    scf.if %2 {
      %c0_64 = arith.constant 0 : index
      %c0_65 = arith.constant 0 : index
      %247 = vector.load %arg5[%c0_64, %c0_65] : memref<8x128xf32, #tpu.memory_space<vmem>>, vector<8x128xf32>
      %c0_66 = arith.constant 0 : index
      %c0_67 = arith.constant 0 : index
      %248 = vector.load %arg7[%c0_66, %c0_67] : memref<8x128xf32, #tpu.memory_space<vmem>>, vector<8x128xf32>
      tpu.vector_store %arg7[%c0_66, %c0_67], %247 {strides = array<i32>} : memref<8x128xf32, #tpu.memory_space<vmem>>, vector<8x128xf32>,
    } else {
    }
    %c0 = arith.constant 0 : index
    %c0_1 = arith.constant 0 : index
    %3 = vector.load %arg3[%c0, %c0_1] : memref<128x384xf32, #tpu.memory_space<vmem>>, vector<128x384xf32>
    %c0_2 = arith.constant 0 : index
    %c0_3 = arith.constant 0 : index
    %4 = vector.load %arg4[%c0_2, %c0_3] : memref<1x128xf32, #tpu.memory_space<vmem>>, vector<1x128xf32>
    %c0_4 = arith.constant 0 : index
    %c0_5 = arith.constant 0 : index
    %5 = vector.load %arg7[%c0_4, %c0_5] : memref<8x128xf32, #tpu.memory_space<vmem>>, vector<8x128xf32>
    %c0_i32_6 = arith.constant 0 : i32
    %6 = arith.index_cast %c0_i32_6 : i32 to index
    %c0_7 = arith.constant 0 : index
    %c0_8 = arith.constant 0 : index
    %7 = vector.load %arg2[%6, %c0_7, %c0_8] : memref<8x8x384xf32, #tpu.memory_space<vmem>>, vector<1x8x384xf32>
    %8 = vector.shape_cast %7 : vector<1x8x384xf32> to vector<8x384xf32>
    %cst = arith.constant dense<0.000000e+00> : vector<8x384xf32>
    %9 = tpu.matmul %5, %3, %cst {dimension_numbers = #tpu.dot_dimension_numbers<[1], [0], [0], [1], [0, 0, 1, 1], [], []>} : vector<8x128xf32>, vector<128x384xf32>, vector<8x384xf32> -> vector<8x384xf32>
    %10 = vector.extract_strided_slice %8 {offsets = [0, 0], sizes = [8, 256], strides = [1, 1]} : vector<8x384xf32> to vector<8x256xf32>
    %11 = vector.extract_strided_slice %9 {offsets = [0, 0], sizes = [8, 256], strides = [1, 1]} : vector<8x384xf32> to vector<8x256xf32>
    %12 = arith.addf %10, %11 : vector<8x256xf32>
    %13 = arith.negf %12 : vector<8x256xf32>
    %14 = math.exp %13 : vector<8x256xf32>
    %cst_9 = arith.constant 1.000000e+00 : f32
    %15 = vector.broadcast %cst_9 : f32 to vector<8x256xf32>
    %16 = arith.addf %15, %14 : vector<8x256xf32>
    %17 = arith.divf %15, %16 : vector<8x256xf32>
    %18 = vector.extract_strided_slice %17 {offsets = [0, 0], sizes = [8, 128], strides = [1, 1]} : vector<8x256xf32> to vector<8x128xf32>
    %19 = vector.extract_strided_slice %17 {offsets = [0, 128], sizes = [8, 128], strides = [1, 1]} : vector<8x256xf32> to vector<8x128xf32>
    %20 = vector.extract_strided_slice %8 {offsets = [0, 256], sizes = [8, 128], strides = [1, 1]} : vector<8x384xf32> to vector<8x128xf32>
    %21 = vector.extract_strided_slice %9 {offsets = [0, 256], sizes = [8, 128], strides = [1, 1]} : vector<8x384xf32> to vector<8x128xf32>
    %22 = vector.broadcast %4 : vector<1x128xf32> to vector<8x128xf32>
    %23 = arith.addf %21, %22 : vector<8x128xf32>
    %24 = arith.mulf %18, %23 : vector<8x128xf32>
    %25 = arith.addf %20, %24 : vector<8x128xf32>
    %26 = math.tanh %25 : vector<8x128xf32>
    %cst_10 = arith.constant 1.000000e+00 : f32
    %27 = vector.broadcast %cst_10 : f32 to vector<8x128xf32>
    %28 = arith.subf %27, %19 : vector<8x128xf32>
    %29 = arith.mulf %28, %26 : vector<8x128xf32>
    %30 = arith.mulf %19, %5 : vector<8x128xf32>
    %31 = arith.addf %29, %30 : vector<8x128xf32>
    %32 = arith.index_cast %c0_i32_6 : i32 to index
    %c0_11 = arith.constant 0 : index
    %c0_12 = arith.constant 0 : index
    %33 = vector.load %arg6[%32, %c0_11, %c0_12] : memref<8x8x128xf32, #tpu.memory_space<vmem>>, vector<1x8x128xf32>
    %34 = vector.shape_cast %33 : vector<1x8x128xf32> to vector<8x128xf32>
    %35 = vector.shape_cast %31 : vector<8x128xf32> to vector<1x8x128xf32>
    tpu.vector_store %arg6[%32, %c0_11, %c0_12], %35 {strides = array<i32>} : memref<8x8x128xf32, #tpu.memory_space<vmem>>, vector<1x8x128xf32>,
    %c1_i32 = arith.constant 1 : i32
    %36 = arith.index_cast %c1_i32 : i32 to index
    %c0_13 = arith.constant 0 : index
    %c0_14 = arith.constant 0 : index
    %37 = vector.load %arg2[%36, %c0_13, %c0_14] : memref<8x8x384xf32, #tpu.memory_space<vmem>>, vector<1x8x384xf32>
    %38 = vector.shape_cast %37 : vector<1x8x384xf32> to vector<8x384xf32>
    %cst_15 = arith.constant dense<0.000000e+00> : vector<8x384xf32>
    %39 = tpu.matmul %31, %3, %cst_15 {dimension_numbers = #tpu.dot_dimension_numbers<[1], [0], [0], [1], [0, 0, 1, 1], [], []>} : vector<8x128xf32>, vector<128x384xf32>, vector<8x384xf32> -> vector<8x384xf32>
    %40 = vector.extract_strided_slice %38 {offsets = [0, 0], sizes = [8, 256], strides = [1, 1]} : vector<8x384xf32> to vector<8x256xf32>
    %41 = vector.extract_strided_slice %39 {offsets = [0, 0], sizes = [8, 256], strides = [1, 1]} : vector<8x384xf32> to vector<8x256xf32>
    %42 = arith.addf %40, %41 : vector<8x256xf32>
    %43 = arith.negf %42 : vector<8x256xf32>
    %44 = math.exp %43 : vector<8x256xf32>
    %cst_16 = arith.constant 1.000000e+00 : f32
    %45 = vector.broadcast %cst_16 : f32 to vector<8x256xf32>
    %46 = arith.addf %45, %44 : vector<8x256xf32>
    %47 = arith.divf %45, %46 : vector<8x256xf32>
    %48 = vector.extract_strided_slice %47 {offsets = [0, 0], sizes = [8, 128], strides = [1, 1]} : vector<8x256xf32> to vector<8x128xf32>
    %49 = vector.extract_strided_slice %47 {offsets = [0, 128], sizes = [8, 128], strides = [1, 1]} : vector<8x256xf32> to vector<8x128xf32>
    %50 = vector.extract_strided_slice %38 {offsets = [0, 256], sizes = [8, 128], strides = [1, 1]} : vector<8x384xf32> to vector<8x128xf32>
    %51 = vector.extract_strided_slice %39 {offsets = [0, 256], sizes = [8, 128], strides = [1, 1]} : vector<8x384xf32> to vector<8x128xf32>
    %52 = vector.broadcast %4 : vector<1x128xf32> to vector<8x128xf32>
    %53 = arith.addf %51, %52 : vector<8x128xf32>
    %54 = arith.mulf %48, %53 : vector<8x128xf32>
    %55 = arith.addf %50, %54 : vector<8x128xf32>
    %56 = math.tanh %55 : vector<8x128xf32>
    %cst_17 = arith.constant 1.000000e+00 : f32
    %57 = vector.broadcast %cst_17 : f32 to vector<8x128xf32>
    %58 = arith.subf %57, %49 : vector<8x128xf32>
    %59 = arith.mulf %58, %56 : vector<8x128xf32>
    %60 = arith.mulf %49, %31 : vector<8x128xf32>
    %61 = arith.addf %59, %60 : vector<8x128xf32>
    %62 = arith.index_cast %c1_i32 : i32 to index
    %c0_18 = arith.constant 0 : index
    %c0_19 = arith.constant 0 : index
    %63 = vector.load %arg6[%62, %c0_18, %c0_19] : memref<8x8x128xf32, #tpu.memory_space<vmem>>, vector<1x8x128xf32>
    %64 = vector.shape_cast %63 : vector<1x8x128xf32> to vector<8x128xf32>
    %65 = vector.shape_cast %61 : vector<8x128xf32> to vector<1x8x128xf32>
    tpu.vector_store %arg6[%62, %c0_18, %c0_19], %65 {strides = array<i32>} : memref<8x8x128xf32, #tpu.memory_space<vmem>>, vector<1x8x128xf32>,
    %c2_i32 = arith.constant 2 : i32
    %66 = arith.index_cast %c2_i32 : i32 to index
    %c0_20 = arith.constant 0 : index
    %c0_21 = arith.constant 0 : index
    %67 = vector.load %arg2[%66, %c0_20, %c0_21] : memref<8x8x384xf32, #tpu.memory_space<vmem>>, vector<1x8x384xf32>
    %68 = vector.shape_cast %67 : vector<1x8x384xf32> to vector<8x384xf32>
    %cst_22 = arith.constant dense<0.000000e+00> : vector<8x384xf32>
    %69 = tpu.matmul %61, %3, %cst_22 {dimension_numbers = #tpu.dot_dimension_numbers<[1], [0], [0], [1], [0, 0, 1, 1], [], []>} : vector<8x128xf32>, vector<128x384xf32>, vector<8x384xf32> -> vector<8x384xf32>
    %70 = vector.extract_strided_slice %68 {offsets = [0, 0], sizes = [8, 256], strides = [1, 1]} : vector<8x384xf32> to vector<8x256xf32>
    %71 = vector.extract_strided_slice %69 {offsets = [0, 0], sizes = [8, 256], strides = [1, 1]} : vector<8x384xf32> to vector<8x256xf32>
    %72 = arith.addf %70, %71 : vector<8x256xf32>
    %73 = arith.negf %72 : vector<8x256xf32>
    %74 = math.exp %73 : vector<8x256xf32>
    %cst_23 = arith.constant 1.000000e+00 : f32
    %75 = vector.broadcast %cst_23 : f32 to vector<8x256xf32>
    %76 = arith.addf %75, %74 : vector<8x256xf32>
    %77 = arith.divf %75, %76 : vector<8x256xf32>
    %78 = vector.extract_strided_slice %77 {offsets = [0, 0], sizes = [8, 128], strides = [1, 1]} : vector<8x256xf32> to vector<8x128xf32>
    %79 = vector.extract_strided_slice %77 {offsets = [0, 128], sizes = [8, 128], strides = [1, 1]} : vector<8x256xf32> to vector<8x128xf32>
    %80 = vector.extract_strided_slice %68 {offsets = [0, 256], sizes = [8, 128], strides = [1, 1]} : vector<8x384xf32> to vector<8x128xf32>
    %81 = vector.extract_strided_slice %69 {offsets = [0, 256], sizes = [8, 128], strides = [1, 1]} : vector<8x384xf32> to vector<8x128xf32>
    %82 = vector.broadcast %4 : vector<1x128xf32> to vector<8x128xf32>
    %83 = arith.addf %81, %82 : vector<8x128xf32>
    %84 = arith.mulf %78, %83 : vector<8x128xf32>
    %85 = arith.addf %80, %84 : vector<8x128xf32>
    %86 = math.tanh %85 : vector<8x128xf32>
    %cst_24 = arith.constant 1.000000e+00 : f32
    %87 = vector.broadcast %cst_24 : f32 to vector<8x128xf32>
    %88 = arith.subf %87, %79 : vector<8x128xf32>
    %89 = arith.mulf %88, %86 : vector<8x128xf32>
    %90 = arith.mulf %79, %61 : vector<8x128xf32>
    %91 = arith.addf %89, %90 : vector<8x128xf32>
    %92 = arith.index_cast %c2_i32 : i32 to index
    %c0_25 = arith.constant 0 : index
    %c0_26 = arith.constant 0 : index
    %93 = vector.load %arg6[%92, %c0_25, %c0_26] : memref<8x8x128xf32, #tpu.memory_space<vmem>>, vector<1x8x128xf32>
    %94 = vector.shape_cast %93 : vector<1x8x128xf32> to vector<8x128xf32>
    %95 = vector.shape_cast %91 : vector<8x128xf32> to vector<1x8x128xf32>
    tpu.vector_store %arg6[%92, %c0_25, %c0_26], %95 {strides = array<i32>} : memref<8x8x128xf32, #tpu.memory_space<vmem>>, vector<1x8x128xf32>,
    %c3_i32 = arith.constant 3 : i32
    %96 = arith.index_cast %c3_i32 : i32 to index
    %c0_27 = arith.constant 0 : index
    %c0_28 = arith.constant 0 : index
    %97 = vector.load %arg2[%96, %c0_27, %c0_28] : memref<8x8x384xf32, #tpu.memory_space<vmem>>, vector<1x8x384xf32>
    %98 = vector.shape_cast %97 : vector<1x8x384xf32> to vector<8x384xf32>
    %cst_29 = arith.constant dense<0.000000e+00> : vector<8x384xf32>
    %99 = tpu.matmul %91, %3, %cst_29 {dimension_numbers = #tpu.dot_dimension_numbers<[1], [0], [0], [1], [0, 0, 1, 1], [], []>} : vector<8x128xf32>, vector<128x384xf32>, vector<8x384xf32> -> vector<8x384xf32>
    %100 = vector.extract_strided_slice %98 {offsets = [0, 0], sizes = [8, 256], strides = [1, 1]} : vector<8x384xf32> to vector<8x256xf32>
    %101 = vector.extract_strided_slice %99 {offsets = [0, 0], sizes = [8, 256], strides = [1, 1]} : vector<8x384xf32> to vector<8x256xf32>
    %102 = arith.addf %100, %101 : vector<8x256xf32>
    %103 = arith.negf %102 : vector<8x256xf32>
    %104 = math.exp %103 : vector<8x256xf32>
    %cst_30 = arith.constant 1.000000e+00 : f32
    %105 = vector.broadcast %cst_30 : f32 to vector<8x256xf32>
    %106 = arith.addf %105, %104 : vector<8x256xf32>
    %107 = arith.divf %105, %106 : vector<8x256xf32>
    %108 = vector.extract_strided_slice %107 {offsets = [0, 0], sizes = [8, 128], strides = [1, 1]} : vector<8x256xf32> to vector<8x128xf32>
    %109 = vector.extract_strided_slice %107 {offsets = [0, 128], sizes = [8, 128], strides = [1, 1]} : vector<8x256xf32> to vector<8x128xf32>
    %110 = vector.extract_strided_slice %98 {offsets = [0, 256], sizes = [8, 128], strides = [1, 1]} : vector<8x384xf32> to vector<8x128xf32>
    %111 = vector.extract_strided_slice %99 {offsets = [0, 256], sizes = [8, 128], strides = [1, 1]} : vector<8x384xf32> to vector<8x128xf32>
    %112 = vector.broadcast %4 : vector<1x128xf32> to vector<8x128xf32>
    %113 = arith.addf %111, %112 : vector<8x128xf32>
    %114 = arith.mulf %108, %113 : vector<8x128xf32>
    %115 = arith.addf %110, %114 : vector<8x128xf32>
    %116 = math.tanh %115 : vector<8x128xf32>
    %cst_31 = arith.constant 1.000000e+00 : f32
    %117 = vector.broadcast %cst_31 : f32 to vector<8x128xf32>
    %118 = arith.subf %117, %109 : vector<8x128xf32>
    %119 = arith.mulf %118, %116 : vector<8x128xf32>
    %120 = arith.mulf %109, %91 : vector<8x128xf32>
    %121 = arith.addf %119, %120 : vector<8x128xf32>
    %122 = arith.index_cast %c3_i32 : i32 to index
    %c0_32 = arith.constant 0 : index
    %c0_33 = arith.constant 0 : index
    %123 = vector.load %arg6[%122, %c0_32, %c0_33] : memref<8x8x128xf32, #tpu.memory_space<vmem>>, vector<1x8x128xf32>
    %124 = vector.shape_cast %123 : vector<1x8x128xf32> to vector<8x128xf32>
    %125 = vector.shape_cast %121 : vector<8x128xf32> to vector<1x8x128xf32>
    tpu.vector_store %arg6[%122, %c0_32, %c0_33], %125 {strides = array<i32>} : memref<8x8x128xf32, #tpu.memory_space<vmem>>, vector<1x8x128xf32>,
    %c4_i32 = arith.constant 4 : i32
    %126 = arith.index_cast %c4_i32 : i32 to index
    %c0_34 = arith.constant 0 : index
    %c0_35 = arith.constant 0 : index
    %127 = vector.load %arg2[%126, %c0_34, %c0_35] : memref<8x8x384xf32, #tpu.memory_space<vmem>>, vector<1x8x384xf32>
    %128 = vector.shape_cast %127 : vector<1x8x384xf32> to vector<8x384xf32>
    %cst_36 = arith.constant dense<0.000000e+00> : vector<8x384xf32>
    %129 = tpu.matmul %121, %3, %cst_36 {dimension_numbers = #tpu.dot_dimension_numbers<[1], [0], [0], [1], [0, 0, 1, 1], [], []>} : vector<8x128xf32>, vector<128x384xf32>, vector<8x384xf32> -> vector<8x384xf32>
    %130 = vector.extract_strided_slice %128 {offsets = [0, 0], sizes = [8, 256], strides = [1, 1]} : vector<8x384xf32> to vector<8x256xf32>
    %131 = vector.extract_strided_slice %129 {offsets = [0, 0], sizes = [8, 256], strides = [1, 1]} : vector<8x384xf32> to vector<8x256xf32>
    %132 = arith.addf %130, %131 : vector<8x256xf32>
    %133 = arith.negf %132 : vector<8x256xf32>
    %134 = math.exp %133 : vector<8x256xf32>
    %cst_37 = arith.constant 1.000000e+00 : f32
    %135 = vector.broadcast %cst_37 : f32 to vector<8x256xf32>
    %136 = arith.addf %135, %134 : vector<8x256xf32>
    %137 = arith.divf %135, %136 : vector<8x256xf32>
    %138 = vector.extract_strided_slice %137 {offsets = [0, 0], sizes = [8, 128], strides = [1, 1]} : vector<8x256xf32> to vector<8x128xf32>
    %139 = vector.extract_strided_slice %137 {offsets = [0, 128], sizes = [8, 128], strides = [1, 1]} : vector<8x256xf32> to vector<8x128xf32>
    %140 = vector.extract_strided_slice %128 {offsets = [0, 256], sizes = [8, 128], strides = [1, 1]} : vector<8x384xf32> to vector<8x128xf32>
    %141 = vector.extract_strided_slice %129 {offsets = [0, 256], sizes = [8, 128], strides = [1, 1]} : vector<8x384xf32> to vector<8x128xf32>
    %142 = vector.broadcast %4 : vector<1x128xf32> to vector<8x128xf32>
    %143 = arith.addf %141, %142 : vector<8x128xf32>
    %144 = arith.mulf %138, %143 : vector<8x128xf32>
    %145 = arith.addf %140, %144 : vector<8x128xf32>
    %146 = math.tanh %145 : vector<8x128xf32>
    %cst_38 = arith.constant 1.000000e+00 : f32
    %147 = vector.broadcast %cst_38 : f32 to vector<8x128xf32>
    %148 = arith.subf %147, %139 : vector<8x128xf32>
    %149 = arith.mulf %148, %146 : vector<8x128xf32>
    %150 = arith.mulf %139, %121 : vector<8x128xf32>
    %151 = arith.addf %149, %150 : vector<8x128xf32>
    %152 = arith.index_cast %c4_i32 : i32 to index
    %c0_39 = arith.constant 0 : index
    %c0_40 = arith.constant 0 : index
    %153 = vector.load %arg6[%152, %c0_39, %c0_40] : memref<8x8x128xf32, #tpu.memory_space<vmem>>, vector<1x8x128xf32>
    %154 = vector.shape_cast %153 : vector<1x8x128xf32> to vector<8x128xf32>
    %155 = vector.shape_cast %151 : vector<8x128xf32> to vector<1x8x128xf32>
    tpu.vector_store %arg6[%152, %c0_39, %c0_40], %155 {strides = array<i32>} : memref<8x8x128xf32, #tpu.memory_space<vmem>>, vector<1x8x128xf32>,
    %c5_i32 = arith.constant 5 : i32
    %156 = arith.index_cast %c5_i32 : i32 to index
    %c0_41 = arith.constant 0 : index
    %c0_42 = arith.constant 0 : index
    %157 = vector.load %arg2[%156, %c0_41, %c0_42] : memref<8x8x384xf32, #tpu.memory_space<vmem>>, vector<1x8x384xf32>
    %158 = vector.shape_cast %157 : vector<1x8x384xf32> to vector<8x384xf32>
    %cst_43 = arith.constant dense<0.000000e+00> : vector<8x384xf32>
    %159 = tpu.matmul %151, %3, %cst_43 {dimension_numbers = #tpu.dot_dimension_numbers<[1], [0], [0], [1], [0, 0, 1, 1], [], []>} : vector<8x128xf32>, vector<128x384xf32>, vector<8x384xf32> -> vector<8x384xf32>
    %160 = vector.extract_strided_slice %158 {offsets = [0, 0], sizes = [8, 256], strides = [1, 1]} : vector<8x384xf32> to vector<8x256xf32>
    %161 = vector.extract_strided_slice %159 {offsets = [0, 0], sizes = [8, 256], strides = [1, 1]} : vector<8x384xf32> to vector<8x256xf32>
    %162 = arith.addf %160, %161 : vector<8x256xf32>
    %163 = arith.negf %162 : vector<8x256xf32>
    %164 = math.exp %163 : vector<8x256xf32>
    %cst_44 = arith.constant 1.000000e+00 : f32
    %165 = vector.broadcast %cst_44 : f32 to vector<8x256xf32>
    %166 = arith.addf %165, %164 : vector<8x256xf32>
    %167 = arith.divf %165, %166 : vector<8x256xf32>
    %168 = vector.extract_strided_slice %167 {offsets = [0, 0], sizes = [8, 128], strides = [1, 1]} : vector<8x256xf32> to vector<8x128xf32>
    %169 = vector.extract_strided_slice %167 {offsets = [0, 128], sizes = [8, 128], strides = [1, 1]} : vector<8x256xf32> to vector<8x128xf32>
    %170 = vector.extract_strided_slice %158 {offsets = [0, 256], sizes = [8, 128], strides = [1, 1]} : vector<8x384xf32> to vector<8x128xf32>
    %171 = vector.extract_strided_slice %159 {offsets = [0, 256], sizes = [8, 128], strides = [1, 1]} : vector<8x384xf32> to vector<8x128xf32>
    %172 = vector.broadcast %4 : vector<1x128xf32> to vector<8x128xf32>
    %173 = arith.addf %171, %172 : vector<8x128xf32>
    %174 = arith.mulf %168, %173 : vector<8x128xf32>
    %175 = arith.addf %170, %174 : vector<8x128xf32>
    %176 = math.tanh %175 : vector<8x128xf32>
    %cst_45 = arith.constant 1.000000e+00 : f32
    %177 = vector.broadcast %cst_45 : f32 to vector<8x128xf32>
    %178 = arith.subf %177, %169 : vector<8x128xf32>
    %179 = arith.mulf %178, %176 : vector<8x128xf32>
    %180 = arith.mulf %169, %151 : vector<8x128xf32>
    %181 = arith.addf %179, %180 : vector<8x128xf32>
    %182 = arith.index_cast %c5_i32 : i32 to index
    %c0_46 = arith.constant 0 : index
    %c0_47 = arith.constant 0 : index
    %183 = vector.load %arg6[%182, %c0_46, %c0_47] : memref<8x8x128xf32, #tpu.memory_space<vmem>>, vector<1x8x128xf32>
    %184 = vector.shape_cast %183 : vector<1x8x128xf32> to vector<8x128xf32>
    %185 = vector.shape_cast %181 : vector<8x128xf32> to vector<1x8x128xf32>
    tpu.vector_store %arg6[%182, %c0_46, %c0_47], %185 {strides = array<i32>} : memref<8x8x128xf32, #tpu.memory_space<vmem>>, vector<1x8x128xf32>,
    %c6_i32 = arith.constant 6 : i32
    %186 = arith.index_cast %c6_i32 : i32 to index
    %c0_48 = arith.constant 0 : index
    %c0_49 = arith.constant 0 : index
    %187 = vector.load %arg2[%186, %c0_48, %c0_49] : memref<8x8x384xf32, #tpu.memory_space<vmem>>, vector<1x8x384xf32>
    %188 = vector.shape_cast %187 : vector<1x8x384xf32> to vector<8x384xf32>
    %cst_50 = arith.constant dense<0.000000e+00> : vector<8x384xf32>
    %189 = tpu.matmul %181, %3, %cst_50 {dimension_numbers = #tpu.dot_dimension_numbers<[1], [0], [0], [1], [0, 0, 1, 1], [], []>} : vector<8x128xf32>, vector<128x384xf32>, vector<8x384xf32> -> vector<8x384xf32>
    %190 = vector.extract_strided_slice %188 {offsets = [0, 0], sizes = [8, 256], strides = [1, 1]} : vector<8x384xf32> to vector<8x256xf32>
    %191 = vector.extract_strided_slice %189 {offsets = [0, 0], sizes = [8, 256], strides = [1, 1]} : vector<8x384xf32> to vector<8x256xf32>
    %192 = arith.addf %190, %191 : vector<8x256xf32>
    %193 = arith.negf %192 : vector<8x256xf32>
    %194 = math.exp %193 : vector<8x256xf32>
    %cst_51 = arith.constant 1.000000e+00 : f32
    %195 = vector.broadcast %cst_51 : f32 to vector<8x256xf32>
    %196 = arith.addf %195, %194 : vector<8x256xf32>
    %197 = arith.divf %195, %196 : vector<8x256xf32>
    %198 = vector.extract_strided_slice %197 {offsets = [0, 0], sizes = [8, 128], strides = [1, 1]} : vector<8x256xf32> to vector<8x128xf32>
    %199 = vector.extract_strided_slice %197 {offsets = [0, 128], sizes = [8, 128], strides = [1, 1]} : vector<8x256xf32> to vector<8x128xf32>
    %200 = vector.extract_strided_slice %188 {offsets = [0, 256], sizes = [8, 128], strides = [1, 1]} : vector<8x384xf32> to vector<8x128xf32>
    %201 = vector.extract_strided_slice %189 {offsets = [0, 256], sizes = [8, 128], strides = [1, 1]} : vector<8x384xf32> to vector<8x128xf32>
    %202 = vector.broadcast %4 : vector<1x128xf32> to vector<8x128xf32>
    %203 = arith.addf %201, %202 : vector<8x128xf32>
    %204 = arith.mulf %198, %203 : vector<8x128xf32>
    %205 = arith.addf %200, %204 : vector<8x128xf32>
    %206 = math.tanh %205 : vector<8x128xf32>
    %cst_52 = arith.constant 1.000000e+00 : f32
    %207 = vector.broadcast %cst_52 : f32 to vector<8x128xf32>
    %208 = arith.subf %207, %199 : vector<8x128xf32>
    %209 = arith.mulf %208, %206 : vector<8x128xf32>
    %210 = arith.mulf %199, %181 : vector<8x128xf32>
    %211 = arith.addf %209, %210 : vector<8x128xf32>
    %212 = arith.index_cast %c6_i32 : i32 to index
    %c0_53 = arith.constant 0 : index
    %c0_54 = arith.constant 0 : index
    %213 = vector.load %arg6[%212, %c0_53, %c0_54] : memref<8x8x128xf32, #tpu.memory_space<vmem>>, vector<1x8x128xf32>
    %214 = vector.shape_cast %213 : vector<1x8x128xf32> to vector<8x128xf32>
    %215 = vector.shape_cast %211 : vector<8x128xf32> to vector<1x8x128xf32>
    tpu.vector_store %arg6[%212, %c0_53, %c0_54], %215 {strides = array<i32>} : memref<8x8x128xf32, #tpu.memory_space<vmem>>, vector<1x8x128xf32>,
    %c7_i32 = arith.constant 7 : i32
    %216 = arith.index_cast %c7_i32 : i32 to index
    %c0_55 = arith.constant 0 : index
    %c0_56 = arith.constant 0 : index
    %217 = vector.load %arg2[%216, %c0_55, %c0_56] : memref<8x8x384xf32, #tpu.memory_space<vmem>>, vector<1x8x384xf32>
    %218 = vector.shape_cast %217 : vector<1x8x384xf32> to vector<8x384xf32>
    %cst_57 = arith.constant dense<0.000000e+00> : vector<8x384xf32>
    %219 = tpu.matmul %211, %3, %cst_57 {dimension_numbers = #tpu.dot_dimension_numbers<[1], [0], [0], [1], [0, 0, 1, 1], [], []>} : vector<8x128xf32>, vector<128x384xf32>, vector<8x384xf32> -> vector<8x384xf32>
    %220 = vector.extract_strided_slice %218 {offsets = [0, 0], sizes = [8, 256], strides = [1, 1]} : vector<8x384xf32> to vector<8x256xf32>
    %221 = vector.extract_strided_slice %219 {offsets = [0, 0], sizes = [8, 256], strides = [1, 1]} : vector<8x384xf32> to vector<8x256xf32>
    %222 = arith.addf %220, %221 : vector<8x256xf32>
    %223 = arith.negf %222 : vector<8x256xf32>
    %224 = math.exp %223 : vector<8x256xf32>
    %cst_58 = arith.constant 1.000000e+00 : f32
    %225 = vector.broadcast %cst_58 : f32 to vector<8x256xf32>
    %226 = arith.addf %225, %224 : vector<8x256xf32>
    %227 = arith.divf %225, %226 : vector<8x256xf32>
    %228 = vector.extract_strided_slice %227 {offsets = [0, 0], sizes = [8, 128], strides = [1, 1]} : vector<8x256xf32> to vector<8x128xf32>
    %229 = vector.extract_strided_slice %227 {offsets = [0, 128], sizes = [8, 128], strides = [1, 1]} : vector<8x256xf32> to vector<8x128xf32>
    %230 = vector.extract_strided_slice %218 {offsets = [0, 256], sizes = [8, 128], strides = [1, 1]} : vector<8x384xf32> to vector<8x128xf32>
    %231 = vector.extract_strided_slice %219 {offsets = [0, 256], sizes = [8, 128], strides = [1, 1]} : vector<8x384xf32> to vector<8x128xf32>
    %232 = vector.broadcast %4 : vector<1x128xf32> to vector<8x128xf32>
    %233 = arith.addf %231, %232 : vector<8x128xf32>
    %234 = arith.mulf %228, %233 : vector<8x128xf32>
    %235 = arith.addf %230, %234 : vector<8x128xf32>
    %236 = math.tanh %235 : vector<8x128xf32>
    %cst_59 = arith.constant 1.000000e+00 : f32
    %237 = vector.broadcast %cst_59 : f32 to vector<8x128xf32>
    %238 = arith.subf %237, %229 : vector<8x128xf32>
    %239 = arith.mulf %238, %236 : vector<8x128xf32>
    %240 = arith.mulf %229, %211 : vector<8x128xf32>
    %241 = arith.addf %239, %240 : vector<8x128xf32>
    %242 = arith.index_cast %c7_i32 : i32 to index
    %c0_60 = arith.constant 0 : index
    %c0_61 = arith.constant 0 : index
    %243 = vector.load %arg6[%242, %c0_60, %c0_61] : memref<8x8x128xf32, #tpu.memory_space<vmem>>, vector<1x8x128xf32>
    %244 = vector.shape_cast %243 : vector<1x8x128xf32> to vector<8x128xf32>
    %245 = vector.shape_cast %241 : vector<8x128xf32> to vector<1x8x128xf32>
    tpu.vector_store %arg6[%242, %c0_60, %c0_61], %245 {strides = array<i32>} : memref<8x8x128xf32, #tpu.memory_space<vmem>>, vector<1x8x128xf32>,
    %c8_i32 = arith.constant 8 : i32
    %c0_62 = arith.constant 0 : index
    %c0_63 = arith.constant 0 : index
    %246 = vector.load %arg7[%c0_62, %c0_63] : memref<8x128xf32, #tpu.memory_space<vmem>>, vector<8x128xf32>
    tpu.vector_store %arg7[%c0_62, %c0_63], %241 {strides = array<i32>} : memref<8x128xf32, #tpu.memory_space<vmem>>, vector<8x128xf32>,
    return
  }
  func.func @transform_0(%arg0: i32, %arg1: i32) -> (i32, i32, i32) {
    %c0_i32 = arith.constant 0 : i32
    %c0_i32_0 = arith.constant 0 : i32
    return %arg1, %arg0, %c0_i32 : i32, i32, i32
  }
  func.func @transform_1(%arg0: i32, %arg1: i32) -> (i32, i32) {
    %c0_i32 = arith.constant 0 : i32
    %c0_i32_0 = arith.constant 0 : i32
    %c0_i32_1 = arith.constant 0 : i32
    return %c0_i32, %c0_i32_0 : i32, i32
  }
  func.func @transform_2(%arg0: i32, %arg1: i32) -> (i32, i32) {
    %c0_i32 = arith.constant 0 : i32
    %c0_i32_0 = arith.constant 0 : i32
    %c0_i32_1 = arith.constant 0 : i32
    return %c0_i32, %c0_i32_0 : i32, i32
  }
  func.func @transform_3(%arg0: i32, %arg1: i32) -> (i32, i32) {
    %c0_i32 = arith.constant 0 : i32
    %c0_i32_0 = arith.constant 0 : i32
    return %arg0, %c0_i32 : i32, i32
  }
  func.func @transform_4(%arg0: i32, %arg1: i32) -> (i32, i32, i32) {
    %c0_i32 = arith.constant 0 : i32
    %c0_i32_0 = arith.constant 0 : i32
    return %arg1, %arg0, %c0_i32 : i32, i32, i32
  }
}

module attributes {stable_mosaic.version = 11 : i64} {
  func.func @gru_head_kernel(%arg0: i32, %arg1: memref<64x128xf32, #tpu.memory_space<vmem>>, %arg2: memref<128x128xf32, #tpu.memory_space<vmem>>, %arg3: memref<64x128xf32, #tpu.memory_space<vmem>>, %arg4: memref<64x128xf32, #tpu.memory_space<vmem>>) attributes {dimension_semantics = [#tpu.dimension_semantics<parallel>], iteration_bounds = array<i64: 1>, scalar_prefetch = 0 : i64, scratch_operands = 0 : i64, tpu.core_type = #tpu.core_type<tc>, window_params = [{transform_indices = @transform_0, window_bounds = array<i64: 64, 128>}, {pipeline_mode = #tpu.pipeline_mode<synchronous>, transform_indices = @transform_1, window_bounds = array<i64: 128, 128>}, {transform_indices = @transform_2, window_bounds = array<i64: 64, 128>}, {transform_indices = @transform_3, window_bounds = array<i64: 64, 128>}]} {
    %c0 = arith.constant 0 : index
    %c0_0 = arith.constant 0 : index
    %0 = vector.load %arg1[%c0, %c0_0] : memref<64x128xf32, #tpu.memory_space<vmem>>, vector<64x128xf32>
    %c0_1 = arith.constant 0 : index
    %c0_2 = arith.constant 0 : index
    %1 = vector.load %arg2[%c0_1, %c0_2] : memref<128x128xf32, #tpu.memory_space<vmem>>, vector<128x128xf32>
    %cst = arith.constant dense<0.000000e+00> : vector<64x128xf32>
    %2 = tpu.matmul %0, %1, %cst {dimension_numbers = #tpu.dot_dimension_numbers<[1], [0], [0], [1], [0, 0, 1, 1], [], []>} : vector<64x128xf32>, vector<128x128xf32>, vector<64x128xf32> -> vector<64x128xf32>
    %c0_3 = arith.constant 0 : index
    %c0_4 = arith.constant 0 : index
    %3 = vector.load %arg3[%c0_3, %c0_4] : memref<64x128xf32, #tpu.memory_space<vmem>>, vector<64x128xf32>
    %4 = arith.addf %2, %3 : vector<64x128xf32>
    %cst_5 = arith.constant dense<0xFF800000> : vector<64xf32>
    %5 = vector.multi_reduction <maximumf>, %4, %cst_5 [1] : vector<64x128xf32> to vector<64xf32>
    %6 = vector.shape_cast %5 : vector<64xf32> to vector<64x1xf32>
    %7 = vector.broadcast %6 : vector<64x1xf32> to vector<64x128xf32>
    %8 = arith.subf %4, %7 : vector<64x128xf32>
    %9 = math.exp %8 : vector<64x128xf32>
    %cst_6 = arith.constant dense<0.000000e+00> : vector<64xf32>
    %10 = vector.multi_reduction <add>, %9, %cst_6 [1] : vector<64x128xf32> to vector<64xf32>
    %11 = vector.shape_cast %10 : vector<64xf32> to vector<64x1xf32>
    %12 = math.log %11 : vector<64x1xf32>
    %13 = vector.broadcast %12 : vector<64x1xf32> to vector<64x128xf32>
    %14 = arith.subf %8, %13 : vector<64x128xf32>
    %c0_7 = arith.constant 0 : index
    %c0_8 = arith.constant 0 : index
    %15 = vector.load %arg4[%c0_7, %c0_8] : memref<64x128xf32, #tpu.memory_space<vmem>>, vector<64x128xf32>
    tpu.vector_store %arg4[%c0_7, %c0_8], %14 {strides = array<i32>} : memref<64x128xf32, #tpu.memory_space<vmem>>, vector<64x128xf32>,
    return
  }
  func.func @transform_0(%arg0: i32) -> (i32, i32) {
    %c0_i32 = arith.constant 0 : i32
    %c0_i32_0 = arith.constant 0 : i32
    return %arg0, %c0_i32 : i32, i32
  }
  func.func @transform_1(%arg0: i32) -> (i32, i32) {
    %c0_i32 = arith.constant 0 : i32
    %c0_i32_0 = arith.constant 0 : i32
    %c0_i32_1 = arith.constant 0 : i32
    return %c0_i32, %c0_i32_0 : i32, i32
  }
  func.func @transform_2(%arg0: i32) -> (i32, i32) {
    %c0_i32 = arith.constant 0 : i32
    %c0_i32_0 = arith.constant 0 : i32
    return %arg0, %c0_i32 : i32, i32
  }
  func.func @transform_3(%arg0: i32) -> (i32, i32) {
    %c0_i32 = arith.constant 0 : i32
    %c0_i32_0 = arith.constant 0 : i32
    return %arg0, %c0_i32 : i32, i32
  }
}

</mosaic_0001>

<llo_original>
// kernel: gru_sequence.3
$region0: #{gru_sequence.3}
  #allocation0 [shape = 'u32[]', space=smem, size = 0x4, offset = 0x4, fixed_abs, tag = 'smem constant byte address 0x4 - core index']
  #allocation1 [shape = 'u32[72,128]{1,0:T(1,128)}', space=vmem, size = 0x9000, scoped, tag = 'internal scratch']
  %s0 = inlined_call_operand.vmem [shape: f32[64,128], index: 0, kind: input, shape index: {}]
  %s1 = inlined_call_operand.vmem [shape: f32[128,128], index: 1, kind: input, shape index: {}]
  %s2 = inlined_call_operand.vmem [shape: f32[64,128], index: 2, kind: input, shape index: {}]
  %s3 = inlined_call_operand.vmem [shape: f32[64,128], index: 3, kind: output, shape index: {}]
  %s4 = sld [smem:[#allocation0]]
  $region22: #{gru_sequence.3} parent=0
    _
  %s6 = ssub.s32 1, %s4
  %s7 = scalar_select 0, %s6, %s4
  // Predicated region
  $region2: #{gru_sequence.3} parent=0 // pred_check
    _
  $region3: #{gru_sequence.3} parent=0 // pred_check_branch
    %9 = sbr.rel (0) target = $region5
  $region4: #{gru_sequence.3} parent=0 // pred_region
    _
  $region5: #{gru_sequence.3} parent=0 // pred_fallthru
    _
  // Predicated region
  $region6: #{gru_sequence.3} parent=0 // pred_check
    _
  $region7: #{gru_sequence.3} parent=0 // pred_check_branch
    %11 = sbr.rel (0) target = $region9
  $region8: #{gru_sequence.3} parent=0 // pred_region
    _
  $region9: #{gru_sequence.3} parent=0 // pred_fallthru
    _
  // Predicated region
  $region10: #{gru_sequence.3} parent=0 // pred_check
    _
  $region11: #{gru_sequence.3} parent=0 // pred_check_branch
    %13 = sbr.rel (0) target = $region13
  $region12: #{gru_sequence.3} parent=0 // pred_region
    _
  $region13: #{gru_sequence.3} parent=0 // pred_fallthru
    _
  %v14 = vld [vmem:[%s0] sm:$0xff]
  %v15 = vld [vmem:[%s0 + $0x8] sm:$0xff]
  %v16 = vld [vmem:[%s0 + $0x10] sm:$0xff]
  %v17 = vld [vmem:[%s0 + $0x18] sm:$0xff]
  %v18 = vld [vmem:[%s0 + $0x20] sm:$0xff]
  %v19 = vld [vmem:[%s0 + $0x28] sm:$0xff]
  %v20 = vld [vmem:[%s0 + $0x30] sm:$0xff]
  %v21 = vld [vmem:[%s0 + $0x38] sm:$0xff]
  %v22 = vld [vmem:[%s1] sm:$0xff]
  %v23 = vld [vmem:[%s1 + $0x8] sm:$0xff]
  %v24 = vld [vmem:[%s1 + $0x10] sm:$0xff]
  %v25 = vld [vmem:[%s1 + $0x18] sm:$0xff]
  %v26 = vld [vmem:[%s1 + $0x20] sm:$0xff]
  %v27 = vld [vmem:[%s1 + $0x28] sm:$0xff]
  %v28 = vld [vmem:[%s1 + $0x30] sm:$0xff]
  %v29 = vld [vmem:[%s1 + $0x38] sm:$0xff]
  %v30 = vld [vmem:[%s1 + $0x40] sm:$0xff]
  %v31 = vld [vmem:[%s1 + $0x48] sm:$0xff]
  %v32 = vld [vmem:[%s1 + $0x50] sm:$0xff]
  %v33 = vld [vmem:[%s1 + $0x58] sm:$0xff]
  %v34 = vld [vmem:[%s1 + $0x60] sm:$0xff]
  %v35 = vld [vmem:[%s1 + $0x68] sm:$0xff]
  %v36 = vld [vmem:[%s1 + $0x70] sm:$0xff]
  %v37 = vld [vmem:[%s1 + $0x78] sm:$0xff]
  %v38 = vld [vmem:[%s2] sm:$0xff]
  %v39 = vld [vmem:[%s2 + $0x8] sm:$0xff]
  %v40 = vld [vmem:[%s2 + $0x10] sm:$0xff]
  %v41 = vld [vmem:[%s2 + $0x18] sm:$0xff]
  %v42 = vld [vmem:[%s2 + $0x20] sm:$0xff]
  %v43 = vld [vmem:[%s2 + $0x28] sm:$0xff]
  %v44 = vld [vmem:[%s2 + $0x30] sm:$0xff]
  %v45 = vld [vmem:[%s2 + $0x38] sm:$0xff]
  %46 = vmatpush.msra.mxu0 %v37
  %47 = vmatpush.msra.mxu0 %v36
  %48 = vmatpush.msra.mxu0 %v35
  %49 = vmatpush.msra.mxu0 %v34
  %50 = vmatpush.msra.mxu0 %v33
  %51 = vmatpush.msra.mxu0 %v32
  %52 = vmatpush.msra.mxu0 %v31
  %53 = vmatpush.msra.mxu0 %v30
  %54 = vmatpush.msra.mxu0 %v29
  %55 = vmatpush.msra.mxu0 %v28
  %56 = vmatpush.msra.mxu0 %v27
  %57 = vmatpush.msra.mxu0 %v26
  %58 = vmatpush.msra.mxu0 %v25
  %59 = vmatpush.msra.mxu0 %v24
  %60 = vmatpush.msra.mxu0 %v23
  %61 = vmatpush.msra.mxu0 %v22
  %62 = vmatmul.f32.gmra.mxu0 %v14
  %v63 = vpop.f32.mrf.mxu0
  %v64 = vadd.f32 %v38, %v63
  %65 = vmatmul.f32.gmra.mxu0 %v15
  %v66 = vpop.f32.mrf.mxu0
  %v67 = vadd.f32 %v39, %v66
  %68 = vmatmul.f32.gmra.mxu0 %v16
  %v69 = vpop.f32.mrf.mxu0
  %v70 = vadd.f32 %v40, %v69
  %71 = vmatmul.f32.gmra.mxu0 %v17
  %v72 = vpop.f32.mrf.mxu0
  %v73 = vadd.f32 %v41, %v72
  %74 = vmatmul.f32.gmra.mxu0 %v18
  %v75 = vpop.f32.mrf.mxu0
  %v76 = vadd.f32 %v42, %v75
  %77 = vmatmul.f32.gmra.mxu0 %v19
  %v78 = vpop.f32.mrf.mxu0
  %v79 = vadd.f32 %v43, %v78
  %80 = vmatmul.f32.gmra.mxu0 %v20
  %v81 = vpop.f32.mrf.mxu0
  %v82 = vadd.f32 %v44, %v81
  %83 = vmatmul.f32.gmra.mxu0 %v21
  %v84 = vpop.f32.mrf.mxu0
  %v85 = vadd.f32 %v45, %v84
  %86 = vdwg.mxu0
  %87 = vmax.xlane.f32.xlu0 %v64
  %v88 = vpop.xlane.xlu0 %87
  %89 = vmax.xlane.f32.xlu0 %v67
  %v90 = vpop.xlane.xlu0 %89
  %91 = vmax.xlane.f32.xlu0 %v70
  %v92 = vpop.xlane.xlu0 %91
  %93 = vmax.xlane.f32.xlu0 %v73
  %v94 = vpop.xlane.xlu0 %93
  %95 = vmax.xlane.f32.xlu0 %v76
  %v96 = vpop.xlane.xlu0 %95
  %97 = vmax.xlane.f32.xlu0 %v79
  %v98 = vpop.xlane.xlu0 %97
  %99 = vmax.xlane.f32.xlu0 %v82
  %v100 = vpop.xlane.xlu0 %99
  %101 = vmax.xlane.f32.xlu0 %v85
  %v102 = vpop.xlane.xlu0 %101
  %v103 = vsub.f32 %v64, %v88
  %v104 = vsub.f32 %v67, %v90
  %v105 = vsub.f32 %v70, %v92
  %v106 = vsub.f32 %v73, %v94
  %v107 = vsub.f32 %v76, %v96
  %v108 = vsub.f32 %v79, %v98
  %v109 = vsub.f32 %v82, %v100
  %v110 = vsub.f32 %v85, %v102
  %v111 = vmul.f32 %v103, 1.442695
  %v112 = vpow.pop %v111
  %v113 = vmul.f32 %v104, 1.442695
  %v114 = vpow.pop %v113
  %v115 = vmul.f32 %v105, 1.442695
  %v116 = vpow.pop %v115
  %v117 = vmul.f32 %v106, 1.442695
  %v118 = vpow.pop %v117
  %v119 = vmul.f32 %v107, 1.442695
  %v120 = vpow.pop %v119
  %v121 = vmul.f32 %v108, 1.442695
  %v122 = vpow.pop %v121
  %v123 = vmul.f32 %v109, 1.442695
  %v124 = vpow.pop %v123
  %v125 = vmul.f32 %v110, 1.442695
  %v126 = vpow.pop %v125
  %127 = vadd.xlane.f32.xlu0 %v112
  %v128 = vpop.xlane.xlu0 %127
  %129 = vadd.xlane.f32.xlu0 %v114
  %v130 = vpop.xlane.xlu0 %129
  %131 = vadd.xlane.f32.xlu0 %v116
  %v132 = vpop.xlane.xlu0 %131
  %133 = vadd.xlane.f32.xlu0 %v118
  %v134 = vpop.xlane.xlu0 %133
  %135 = vadd.xlane.f32.xlu0 %v120
  %v136 = vpop.xlane.xlu0 %135
  %137 = vadd.xlane.f32.xlu0 %v122
  %v138 = vpop.xlane.xlu0 %137
  %139 = vadd.xlane.f32.xlu0 %v124
  %v140 = vpop.xlane.xlu0 %139
  %141 = vadd.xlane.f32.xlu0 %v126
  %v142 = vpop.xlane.xlu0 %141
  %v143 = vlog2.pop %v128
  %v144 = vmul.f32 %v143, 0.6931472
  %v145 = vlog2.pop %v130
  %v146 = vmul.f32 %v145, 0.6931472
  %v147 = vlog2.pop %v132
  %v148 = vmul.f32 %v147, 0.6931472
  %v149 = vlog2.pop %v134
  %v150 = vmul.f32 %v149, 0.6931472
  %v151 = vlog2.pop %v136
  %v152 = vmul.f32 %v151, 0.6931472
  %v153 = vlog2.pop %v138
  %v154 = vmul.f32 %v153, 0.6931472
  %v155 = vlog2.pop %v140
  %v156 = vmul.f32 %v155, 0.6931472
  %v157 = vlog2.pop %v142
  %v158 = vmul.f32 %v157, 0.6931472
  %v159 = vsub.f32 %v103, %v144
  %v160 = vsub.f32 %v104, %v146
  %v161 = vsub.f32 %v105, %v148
  %v162 = vsub.f32 %v106, %v150
  %v163 = vsub.f32 %v107, %v152
  %v164 = vsub.f32 %v108, %v154
  %v165 = vsub.f32 %v109, %v156
  %v166 = vsub.f32 %v110, %v158
  %167 = vst [vmem:[%s3] sm:$0xff] %v159
  %168 = vst [vmem:[%s3 + $0x8] sm:$0xff] %v160
  %169 = vst [vmem:[%s3 + $0x10] sm:$0xff] %v161
  %170 = vst [vmem:[%s3 + $0x18] sm:$0xff] %v162
  %171 = vst [vmem:[%s3 + $0x20] sm:$0xff] %v163
  %172 = vst [vmem:[%s3 + $0x28] sm:$0xff] %v164
  %173 = vst [vmem:[%s3 + $0x30] sm:$0xff] %v165
  %174 = vst [vmem:[%s3 + $0x38] sm:$0xff] %v166
  // Predicated region
  $region14: #{gru_sequence.3} parent=0 // pred_check
    _
  $region15: #{gru_sequence.3} parent=0 // pred_check_branch
    %176 = sbr.rel (0) target = $region17
  $region16: #{gru_sequence.3} parent=0 // pred_region
    _
  $region17: #{gru_sequence.3} parent=0 // pred_fallthru
    _
  // Predicated region
  $region18: #{gru_sequence.3} parent=0 // pred_check
    _
  $region19: #{gru_sequence.3} parent=0 // pred_check_branch
    %178 = sbr.rel (0) target = $region21
  $region20: #{gru_sequence.3} parent=0 // pred_region
    _
  $region21: #{gru_sequence.3} parent=0 // pred_fallthru
    _

// kernel: gru_sequence.2
$region0: #{gru_sequence.2}
  #allocation0 [shape = 'u32[]', space=smem, size = 0x4, offset = 0x4, fixed_abs, tag = 'smem constant byte address 0x4 - core index']
  #allocation1 [shape = 'u32[72,128]{1,0:T(1,128)}', space=vmem, size = 0x9000, scoped, tag = 'internal scratch']
  #allocation2 [shape = 'f32[8,128]{1,0:T(8,128)}', space=vmem, size = 0x1000, scoped, tag = 'scratch operand']
  %s0 = inlined_call_operand.vmem [shape: f32[8,8,384], index: 0, kind: input, shape index: {}]
  %s1 = inlined_call_operand.vmem [shape: f32[128,384], index: 1, kind: input, shape index: {}]
  %s2 = inlined_call_operand.vmem [shape: f32[1,128], index: 2, kind: input, shape index: {}]
  %s3 = inlined_call_operand.vmem [shape: f32[8,128], index: 3, kind: input, shape index: {}]
  %s4 = inlined_call_operand.vmem [shape: f32[8,8,128], index: 4, kind: output, shape index: {}]
  %s5 = sld [smem:[#allocation0]]
  $region30: #{gru_sequence.2} parent=0
    _
  %s7 = ssub.s32 1, %s5
  %s8 = scalar_select 0, %s7, %s5
  // Predicated region
  $region2: #{gru_sequence.2} parent=0 // pred_check
    _
  $region3: #{gru_sequence.2} parent=0 // pred_check_branch
    %10 = sbr.rel (0) target = $region5
  $region4: #{gru_sequence.2} parent=0 // pred_region
    _
  $region5: #{gru_sequence.2} parent=0 // pred_fallthru
    _
  // Predicated region
  $region6: #{gru_sequence.2} parent=0 // pred_check
    _
  $region7: #{gru_sequence.2} parent=0 // pred_check_branch
    %12 = sbr.rel (0) target = $region9
  $region8: #{gru_sequence.2} parent=0 // pred_region
    _
  $region9: #{gru_sequence.2} parent=0 // pred_fallthru
    _
  // Predicated region
  $region10: #{gru_sequence.2} parent=0 // pred_check
    _
  $region11: #{gru_sequence.2} parent=0 // pred_check_branch
    %14 = sbr.rel (0) target = $region13
  $region12: #{gru_sequence.2} parent=0 // pred_region
    _
  $region13: #{gru_sequence.2} parent=0 // pred_fallthru
    _
  // Predicated region
  $region14: #{gru_sequence.2} parent=0 // pred_check
    _
  $region15: #{gru_sequence.2} parent=0 // pred_check_branch
    %16 = sbr.rel (0) target = $region17
  $region16: #{gru_sequence.2} parent=0 // pred_region
    _
  $region17: #{gru_sequence.2} parent=0 // pred_fallthru
    _
  %p17 = scmp.eq.s32.totalorder 0, 0
  // Predicated region
  $region18: #{gru_sequence.2} parent=0 // pred_check
    %p18 = pneg %p17
  $region19: #{gru_sequence.2} parent=0 // pred_check_branch
    %20 = sbr.rel (%p18) target = $region21
  $region20: #{gru_sequence.2} parent=0 // pred_region
    %v21 = vld [vmem:[%s3] sm:$0xff]
    %22 = vst [vmem:[#allocation2] sm:$0xff] %v21
  $region21: #{gru_sequence.2} parent=0 // pred_fallthru
    _
  %v23 = vld [vmem:[%s1] sm:$0xff]
  %v24 = vld [vmem:[%s1 + $0x8] sm:$0xff]
  %v25 = vld [vmem:[%s1 + $0x10] sm:$0xff]
  %v26 = vld [vmem:[%s1 + $0x18] sm:$0xff]
  %v27 = vld [vmem:[%s1 + $0x20] sm:$0xff]
  %v28 = vld [vmem:[%s1 + $0x28] sm:$0xff]
  %v29 = vld [vmem:[%s1 + $0x30] sm:$0xff]
  %v30 = vld [vmem:[%s1 + $0x38] sm:$0xff]
  %v31 = vld [vmem:[%s1 + $0x40] sm:$0xff]
  %v32 = vld [vmem:[%s1 + $0x48] sm:$0xff]
  %v33 = vld [vmem:[%s1 + $0x50] sm:$0xff]
  %v34 = vld [vmem:[%s1 + $0x58] sm:$0xff]
  %v35 = vld [vmem:[%s1 + $0x60] sm:$0xff]
  %v36 = vld [vmem:[%s1 + $0x68] sm:$0xff]
  %v37 = vld [vmem:[%s1 + $0x70] sm:$0xff]
  %v38 = vld [vmem:[%s1 + $0x78] sm:$0xff]
  %v39 = vld [vmem:[%s1 + $0x80] sm:$0xff]
  %v40 = vld [vmem:[%s1 + $0x88] sm:$0xff]
  %v41 = vld [vmem:[%s1 + $0x90] sm:$0xff]
  %v42 = vld [vmem:[%s1 + $0x98] sm:$0xff]
  %v43 = vld [vmem:[%s1 + $0xa0] sm:$0xff]
  %v44 = vld [vmem:[%s1 + $0xa8] sm:$0xff]
  %v45 = vld [vmem:[%s1 + $0xb0] sm:$0xff]
  %v46 = vld [vmem:[%s1 + $0xb8] sm:$0xff]
  %v47 = vld [vmem:[%s1 + $0xc0] sm:$0xff]
  %v48 = vld [vmem:[%s1 + $0xc8] sm:$0xff]
  %v49 = vld [vmem:[%s1 + $0xd0] sm:$0xff]
  %v50 = vld [vmem:[%s1 + $0xd8] sm:$0xff]
  %v51 = vld [vmem:[%s1 + $0xe0] sm:$0xff]
  %v52 = vld [vmem:[%s1 + $0xe8] sm:$0xff]
  %v53 = vld [vmem:[%s1 + $0xf0] sm:$0xff]
  %v54 = vld [vmem:[%s1 + $0xf8] sm:$0xff]
  %v55 = vld [vmem:[%s1 + $0x100] sm:$0xff]
  %v56 = vld [vmem:[%s1 + $0x108] sm:$0xff]
  %v57 = vld [vmem:[%s1 + $0x110] sm:$0xff]
  %v58 = vld [vmem:[%s1 + $0x118] sm:$0xff]
  %v59 = vld [vmem:[%s1 + $0x120] sm:$0xff]
  %v60 = vld [vmem:[%s1 + $0x128] sm:$0xff]
  %v61 = vld [vmem:[%s1 + $0x130] sm:$0xff]
  %v62 = vld [vmem:[%s1 + $0x138] sm:$0xff]
  %v63 = vld [vmem:[%s1 + $0x140] sm:$0xff]
  %v64 = vld [vmem:[%s1 + $0x148] sm:$0xff]
  %v65 = vld [vmem:[%s1 + $0x150] sm:$0xff]
  %v66 = vld [vmem:[%s1 + $0x158] sm:$0xff]
  %v67 = vld [vmem:[%s1 + $0x160] sm:$0xff]
  %v68 = vld [vmem:[%s1 + $0x168] sm:$0xff]
  %v69 = vld [vmem:[%s1 + $0x170] sm:$0xff]
  %v70 = vld [vmem:[%s1 + $0x178] sm:$0xff]
  %v71 = vld [vmem:[%s2] sm:$0x1]
  %v72 = vld [vmem:[#allocation2] sm:$0xff]
  %v73 = vld [vmem:[%s0] sm:$0xff]
  %v74 = vld [vmem:[%s0 + $0x8] sm:$0xff]
  %v75 = vld [vmem:[%s0 + $0x10] sm:$0xff]
  %76 = vmatpush.msra.mxu0 %v68
  %77 = vmatpush.msra.mxu0 %v65
  %78 = vmatpush.msra.mxu0 %v62
  %79 = vmatpush.msra.mxu0 %v59
  %80 = vmatpush.msra.mxu0 %v56
  %81 = vmatpush.msra.mxu0 %v53
  %82 = vmatpush.msra.mxu0 %v50
  %83 = vmatpush.msra.mxu0 %v47
  %84 = vmatpush.msra.mxu0 %v44
  %85 = vmatpush.msra.mxu0 %v41
  %86 = vmatpush.msra.mxu0 %v38
  %87 = vmatpush.msra.mxu0 %v35
  %88 = vmatpush.msra.mxu0 %v32
  %89 = vmatpush.msra.mxu0 %v29
  %90 = vmatpush.msra.mxu0 %v26
  %91 = vmatpush.msra.mxu0 %v23
  %92 = vmatmul.f32.gmra.mxu0 %v72
  %v93 = vpop.f32.mrf.mxu0
  %v94 = vadd.f32 0.0, %v93
  %95 = vdwg.mxu0
  %96 = vmatpush.msra.mxu0 %v69
  %97 = vmatpush.msra.mxu0 %v66
  %98 = vmatpush.msra.mxu0 %v63
  %99 = vmatpush.msra.mxu0 %v60
  %100 = vmatpush.msra.mxu0 %v57
  %101 = vmatpush.msra.mxu0 %v54
  %102 = vmatpush.msra.mxu0 %v51
  %103 = vmatpush.msra.mxu0 %v48
  %104 = vmatpush.msra.mxu0 %v45
  %105 = vmatpush.msra.mxu0 %v42
  %106 = vmatpush.msra.mxu0 %v39
  %107 = vmatpush.msra.mxu0 %v36
  %108 = vmatpush.msra.mxu0 %v33
  %109 = vmatpush.msra.mxu0 %v30
  %110 = vmatpush.msra.mxu0 %v27
  %111 = vmatpush.msra.mxu0 %v24
  %112 = vmatmul.f32.gmra.mxu0 %v72
  %v113 = vpop.f32.mrf.mxu0
  %v114 = vadd.f32 0.0, %v113
  %115 = vdwg.mxu0
  %116 = vmatpush.msra.mxu0 %v70
  %117 = vmatpush.msra.mxu0 %v67
  %118 = vmatpush.msra.mxu0 %v64
  %119 = vmatpush.msra.mxu0 %v61
  %120 = vmatpush.msra.mxu0 %v58
  %121 = vmatpush.msra.mxu0 %v55
  %122 = vmatpush.msra.mxu0 %v52
  %123 = vmatpush.msra.mxu0 %v49
  %124 = vmatpush.msra.mxu0 %v46
  %125 = vmatpush.msra.mxu0 %v43
  %126 = vmatpush.msra.mxu0 %v40
  %127 = vmatpush.msra.mxu0 %v37
  %128 = vmatpush.msra.mxu0 %v34
  %129 = vmatpush.msra.mxu0 %v31
  %130 = vmatpush.msra.mxu0 %v28
  %131 = vmatpush.msra.mxu0 %v25
  %132 = vmatmul.f32.gmra.mxu0 %v72
  %v133 = vpop.f32.mrf.mxu0
  %v134 = vadd.f32 0.0, %v133
  %135 = vdwg.mxu0
  %v136 = vadd.f32 %v73, %v94
  %v137 = vadd.f32 %v74, %v114
  %v138 = vxor.u32 %v136, 2147483648
  %v139 = vxor.u32 %v137, 2147483648
  %v140 = vmul.f32 %v138, 1.442695
  %v141 = vpow.pop %v140
  %v142 = vmul.f32 %v139, 1.442695
  %v143 = vpow.pop %v142
  %v144 = vadd.f32 %v141, 1.0
  %v145 = vadd.f32 %v143, 1.0
  %v146 = vrcp.pop %v144
  %v147 = vmul.f32 %v144, %v146
  %v148 = vsub.f32 1.0, %v147
  %v149 = vmul.f32 %v146, %v148
  %v150 = vadd.f32 %v146, %v149
  %vm151 = vweird.f32 %v144
  %vm152 = vweird.f32 %v146
  %vm153 = vmor %vm151, %vm152
  %v154 = vsel %vm153, %v146, %v150
  %v155 = vand.u32 2147483647, %v144
  %vm156 = vcmp.eq.f32.partialorder %v155, 8.507059e+37
  %v157 = vand.u32 %v144, 2147483648
  %v158 = vor.u32 1.1754944e-38, %v157
  %v159 = vsel %vm156, %v158, %v154
  %v160 = vmul.f32 1.0, %v159
  %v161 = vrcp.pop %v145
  %v162 = vmul.f32 %v145, %v161
  %v163 = vsub.f32 1.0, %v162
  %v164 = vmul.f32 %v161, %v163
  %v165 = vadd.f32 %v161, %v164
  %vm166 = vweird.f32 %v145
  %vm167 = vweird.f32 %v161
  %vm168 = vmor %vm166, %vm167
  %v169 = vsel %vm168, %v161, %v165
  %v170 = vand.u32 2147483647, %v145
  %vm171 = vcmp.eq.f32.partialorder %v170, 8.507059e+37
  %v172 = vand.u32 %v145, 2147483648
  %v173 = vor.u32 1.1754944e-38, %v172
  %v174 = vsel %vm171, %v173, %v169
  %v175 = vmul.f32 1.0, %v174
  %v177 = vperm.slane %v71, 0
  %v179 = vadd.f32 %v134, %v177
  %v180 = vmul.f32 %v160, %v179
  %v181 = vadd.f32 %v75, %v180
  %v182 = vtanh.pop %v181
  %v183 = vsub.f32 1.0, %v175
  %v184 = vmul.f32 %v183, %v182
  %v185 = vmul.f32 %v175, %v72
  %v186 = vadd.f32 %v184, %v185
  %187 = vst [vmem:[%s4] sm:$0xff] %v186
  %s188 = scalar_lea.vmem %s0, 24
  %v189 = vld [vmem:[%s188] sm:$0xff]
  %v190 = vld [vmem:[%s188 + $0x8] sm:$0xff]
  %v191 = vld [vmem:[%s188 + $0x10] sm:$0xff]
  %192 = vmatpush.msra.mxu0 %v68
  %193 = vmatpush.msra.mxu0 %v65
  %194 = vmatpush.msra.mxu0 %v62
  %195 = vmatpush.msra.mxu0 %v59
  %196 = vmatpush.msra.mxu0 %v56
  %197 = vmatpush.msra.mxu0 %v53
  %198 = vmatpush.msra.mxu0 %v50
  %199 = vmatpush.msra.mxu0 %v47
  %200 = vmatpush.msra.mxu0 %v44
  %201 = vmatpush.msra.mxu0 %v41
  %202 = vmatpush.msra.mxu0 %v38
  %203 = vmatpush.msra.mxu0 %v35
  %204 = vmatpush.msra.mxu0 %v32
  %205 = vmatpush.msra.mxu0 %v29
  %206 = vmatpush.msra.mxu0 %v26
  %207 = vmatpush.msra.mxu0 %v23
  %208 = vmatmul.f32.gmra.mxu0 %v186
  %v209 = vpop.f32.mrf.mxu0
  %v210 = vadd.f32 0.0, %v209
  %211 = vdwg.mxu0
  %212 = vmatpush.msra.mxu0 %v69
  %213 = vmatpush.msra.mxu0 %v66
  %214 = vmatpush.msra.mxu0 %v63
  %215 = vmatpush.msra.mxu0 %v60
  %216 = vmatpush.msra.mxu0 %v57
  %217 = vmatpush.msra.mxu0 %v54
  %218 = vmatpush.msra.mxu0 %v51
  %219 = vmatpush.msra.mxu0 %v48
  %220 = vmatpush.msra.mxu0 %v45
  %221 = vmatpush.msra.mxu0 %v42
  %222 = vmatpush.msra.mxu0 %v39
  %223 = vmatpush.msra.mxu0 %v36
  %224 = vmatpush.msra.mxu0 %v33
  %225 = vmatpush.msra.mxu0 %v30
  %226 = vmatpush.msra.mxu0 %v27
  %227 = vmatpush.msra.mxu0 %v24
  %228 = vmatmul.f32.gmra.mxu0 %v186
  %v229 = vpop.f32.mrf.mxu0
  %v230 = vadd.f32 0.0, %v229
  %231 = vdwg.mxu0
  %232 = vmatpush.msra.mxu0 %v70
  %233 = vmatpush.msra.mxu0 %v67
  %234 = vmatpush.msra.mxu0 %v64
  %235 = vmatpush.msra.mxu0 %v61
  %236 = vmatpush.msra.mxu0 %v58
  %237 = vmatpush.msra.mxu0 %v55
  %238 = vmatpush.msra.mxu0 %v52
  %239 = vmatpush.msra.mxu0 %v49
  %240 = vmatpush.msra.mxu0 %v46
  %241 = vmatpush.msra.mxu0 %v43
  %242 = vmatpush.msra.mxu0 %v40
  %243 = vmatpush.msra.mxu0 %v37
  %244 = vmatpush.msra.mxu0 %v34
  %245 = vmatpush.msra.mxu0 %v31
  %246 = vmatpush.msra.mxu0 %v28
  %247 = vmatpush.msra.mxu0 %v25
  %248 = vmatmul.f32.gmra.mxu0 %v186
  %v249 = vpop.f32.mrf.mxu0
  %v250 = vadd.f32 0.0, %v249
  %251 = vdwg.mxu0
  %v252 = vadd.f32 %v189, %v210
  %v253 = vadd.f32 %v190, %v230
  %v254 = vxor.u32 %v252, 2147483648
  %v255 = vxor.u32 %v253, 2147483648
  %v256 = vmul.f32 %v254, 1.442695
  %v257 = vpow.pop %v256
  %v258 = vmul.f32 %v255, 1.442695
  %v259 = vpow.pop %v258
  %v260 = vadd.f32 %v257, 1.0
  %v261 = vadd.f32 %v259, 1.0
  %v262 = vrcp.pop %v260
  %v263 = vmul.f32 %v260, %v262
  %v264 = vsub.f32 1.0, %v263
  %v265 = vmul.f32 %v262, %v264
  %v266 = vadd.f32 %v262, %v265
  %vm267 = vweird.f32 %v260
  %vm268 = vweird.f32 %v262
  %vm269 = vmor %vm267, %vm268
  %v270 = vsel %vm269, %v262, %v266
  %v271 = vand.u32 2147483647, %v260
  %vm272 = vcmp.eq.f32.partialorder %v271, 8.507059e+37
  %v273 = vand.u32 %v260, 2147483648
  %v274 = vor.u32 1.1754944e-38, %v273
  %v275 = vsel %vm272, %v274, %v270
  %v276 = vmul.f32 1.0, %v275
  %v277 = vrcp.pop %v261
  %v278 = vmul.f32 %v261, %v277
  %v279 = vsub.f32 1.0, %v278
  %v280 = vmul.f32 %v277, %v279
  %v281 = vadd.f32 %v277, %v280
  %vm282 = vweird.f32 %v261
  %vm283 = vweird.f32 %v277
  %vm284 = vmor %vm282, %vm283
  %v285 = vsel %vm284, %v277, %v281
  %v286 = vand.u32 2147483647, %v261
  %vm287 = vcmp.eq.f32.partialorder %v286, 8.507059e+37
  %v288 = vand.u32 %v261, 2147483648
  %v289 = vor.u32 1.1754944e-38, %v288
  %v290 = vsel %vm287, %v289, %v285
  %v291 = vmul.f32 1.0, %v290
  %v292 = vadd.f32 %v250, %v177
  %v293 = vmul.f32 %v276, %v292
  %v294 = vadd.f32 %v191, %v293
  %v295 = vtanh.pop %v294
  %v296 = vsub.f32 1.0, %v291
  %v297 = vmul.f32 %v296, %v295
  %v298 = vmul.f32 %v291, %v186
  %v299 = vadd.f32 %v297, %v298
  %s300 = scalar_lea.vmem %s4, 8
  %301 = vst [vmem:[%s300] sm:$0xff] %v299
  %s302 = scalar_lea.vmem %s0, 48
  %v303 = vld [vmem:[%s302] sm:$0xff]
  %v304 = vld [vmem:[%s302 + $0x8] sm:$0xff]
  %v305 = vld [vmem:[%s302 + $0x10] sm:$0xff]
  %306 = vmatpush.msra.mxu0 %v68
  %307 = vmatpush.msra.mxu0 %v65
  %308 = vmatpush.msra.mxu0 %v62
  %309 = vmatpush.msra.mxu0 %v59
  %310 = vmatpush.msra.mxu0 %v56
  %311 = vmatpush.msra.mxu0 %v53
  %312 = vmatpush.msra.mxu0 %v50
  %313 = vmatpush.msra.mxu0 %v47
  %314 = vmatpush.msra.mxu0 %v44
  %315 = vmatpush.msra.mxu0 %v41
  %316 = vmatpush.msra.mxu0 %v38
  %317 = vmatpush.msra.mxu0 %v35
  %318 = vmatpush.msra.mxu0 %v32
  %319 = vmatpush.msra.mxu0 %v29
  %320 = vmatpush.msra.mxu0 %v26
  %321 = vmatpush.msra.mxu0 %v23
  %322 = vmatmul.f32.gmra.mxu0 %v299
  %v323 = vpop.f32.mrf.mxu0
  %v324 = vadd.f32 0.0, %v323
  %325 = vdwg.mxu0
  %326 = vmatpush.msra.mxu0 %v69
  %327 = vmatpush.msra.mxu0 %v66
  %328 = vmatpush.msra.mxu0 %v63
  %329 = vmatpush.msra.mxu0 %v60
  %330 = vmatpush.msra.mxu0 %v57
  %331 = vmatpush.msra.mxu0 %v54
  %332 = vmatpush.msra.mxu0 %v51
  %333 = vmatpush.msra.mxu0 %v48
  %334 = vmatpush.msra.mxu0 %v45
  %335 = vmatpush.msra.mxu0 %v42
  %336 = vmatpush.msra.mxu0 %v39
  %337 = vmatpush.msra.mxu0 %v36
  %338 = vmatpush.msra.mxu0 %v33
  %339 = vmatpush.msra.mxu0 %v30
  %340 = vmatpush.msra.mxu0 %v27
  %341 = vmatpush.msra.mxu0 %v24
  %342 = vmatmul.f32.gmra.mxu0 %v299
  %v343 = vpop.f32.mrf.mxu0
  %v344 = vadd.f32 0.0, %v343
  %345 = vdwg.mxu0
  %346 = vmatpush.msra.mxu0 %v70
  %347 = vmatpush.msra.mxu0 %v67
  %348 = vmatpush.msra.mxu0 %v64
  %349 = vmatpush.msra.mxu0 %v61
  %350 = vmatpush.msra.mxu0 %v58
  %351 = vmatpush.msra.mxu0 %v55
  %352 = vmatpush.msra.mxu0 %v52
  %353 = vmatpush.msra.mxu0 %v49
  %354 = vmatpush.msra.mxu0 %v46
  %355 = vmatpush.msra.mxu0 %v43
  %356 = vmatpush.msra.mxu0 %v40
  %357 = vmatpush.msra.mxu0 %v37
  %358 = vmatpush.msra.mxu0 %v34
  %359 = vmatpush.msra.mxu0 %v31
  %360 = vmatpush.msra.mxu0 %v28
  %361 = vmatpush.msra.mxu0 %v25
  %362 = vmatmul.f32.gmra.mxu0 %v299
  %v363 = vpop.f32.mrf.mxu0
  %v364 = vadd.f32 0.0, %v363
  %365 = vdwg.mxu0
  %v366 = vadd.f32 %v303, %v324
  %v367 = vadd.f32 %v304, %v344
  %v368 = vxor.u32 %v366, 2147483648
  %v369 = vxor.u32 %v367, 2147483648
  %v370 = vmul.f32 %v368, 1.442695
  %v371 = vpow.pop %v370
  %v372 = vmul.f32 %v369, 1.442695
  %v373 = vpow.pop %v372
  %v374 = vadd.f32 %v371, 1.0
  %v375 = vadd.f32 %v373, 1.0
  %v376 = vrcp.pop %v374
  %v377 = vmul.f32 %v374, %v376
  %v378 = vsub.f32 1.0, %v377
  %v379 = vmul.f32 %v376, %v378
  %v380 = vadd.f32 %v376, %v379
  %vm381 = vweird.f32 %v374
  %vm382 = vweird.f32 %v376
  %vm383 = vmor %vm381, %vm382
  %v384 = vsel %vm383, %v376, %v380
  %v385 = vand.u32 2147483647, %v374
  %vm386 = vcmp.eq.f32.partialorder %v385, 8.507059e+37
  %v387 = vand.u32 %v374, 2147483648
  %v388 = vor.u32 1.1754944e-38, %v387
  %v389 = vsel %vm386, %v388, %v384
  %v390 = vmul.f32 1.0, %v389
  %v391 = vrcp.pop %v375
  %v392 = vmul.f32 %v375, %v391
  %v393 = vsub.f32 1.0, %v392
  %v394 = vmul.f32 %v391, %v393
  %v395 = vadd.f32 %v391, %v394
  %vm396 = vweird.f32 %v375
  %vm397 = vweird.f32 %v391
  %vm398 = vmor %vm396, %vm397
  %v399 = vsel %vm398, %v391, %v395
  %v400 = vand.u32 2147483647, %v375
  %vm401 = vcmp.eq.f32.partialorder %v400, 8.507059e+37
  %v402 = vand.u32 %v375, 2147483648
  %v403 = vor.u32 1.1754944e-38, %v402
  %v404 = vsel %vm401, %v403, %v399
  %v405 = vmul.f32 1.0, %v404
  %v406 = vadd.f32 %v364, %v177
  %v407 = vmul.f32 %v390, %v406
  %v408 = vadd.f32 %v305, %v407
  %v409 = vtanh.pop %v408
  %v410 = vsub.f32 1.0, %v405
  %v411 = vmul.f32 %v410, %v409
  %v412 = vmul.f32 %v405, %v299
  %v413 = vadd.f32 %v411, %v412
  %s414 = scalar_lea.vmem %s4, 16
  %415 = vst [vmem:[%s414] sm:$0xff] %v413
  %s416 = scalar_lea.vmem %s0, 72
  %v417 = vld [vmem:[%s416] sm:$0xff]
  %v418 = vld [vmem:[%s416 + $0x8] sm:$0xff]
  %v419 = vld [vmem:[%s416 + $0x10] sm:$0xff]
  %420 = vmatpush.msra.mxu0 %v68
  %421 = vmatpush.msra.mxu0 %v65
  %422 = vmatpush.msra.mxu0 %v62
  %423 = vmatpush.msra.mxu0 %v59
  %424 = vmatpush.msra.mxu0 %v56
  %425 = vmatpush.msra.mxu0 %v53
  %426 = vmatpush.msra.mxu0 %v50
  %427 = vmatpush.msra.mxu0 %v47
  %428 = vmatpush.msra.mxu0 %v44
  %429 = vmatpush.msra.mxu0 %v41
  %430 = vmatpush.msra.mxu0 %v38
  %431 = vmatpush.msra.mxu0 %v35
  %432 = vmatpush.msra.mxu0 %v32
  %433 = vmatpush.msra.mxu0 %v29
  %434 = vmatpush.msra.mxu0 %v26
  %435 = vmatpush.msra.mxu0 %v23
  %436 = vmatmul.f32.gmra.mxu0 %v413
  %v437 = vpop.f32.mrf.mxu0
  %v438 = vadd.f32 0.0, %v437
  %439 = vdwg.mxu0
  %440 = vmatpush.msra.mxu0 %v69
  %441 = vmatpush.msra.mxu0 %v66
  %442 = vmatpush.msra.mxu0 %v63
  %443 = vmatpush.msra.mxu0 %v60
  %444 = vmatpush.msra.mxu0 %v57
  %445 = vmatpush.msra.mxu0 %v54
  %446 = vmatpush.msra.mxu0 %v51
  %447 = vmatpush.msra.mxu0 %v48
  %448 = vmatpush.msra.mxu0 %v45
  %449 = vmatpush.msra.mxu0 %v42
  %450 = vmatpush.msra.mxu0 %v39
  %451 = vmatpush.msra.mxu0 %v36
  %452 = vmatpush.msra.mxu0 %v33
  %453 = vmatpush.msra.mxu0 %v30
  %454 = vmatpush.msra.mxu0 %v27
  %455 = vmatpush.msra.mxu0 %v24
  %456 = vmatmul.f32.gmra.mxu0 %v413
  %v457 = vpop.f32.mrf.mxu0
  %v458 = vadd.f32 0.0, %v457
  %459 = vdwg.mxu0
  %460 = vmatpush.msra.mxu0 %v70
  %461 = vmatpush.msra.mxu0 %v67
  %462 = vmatpush.msra.mxu0 %v64
  %463 = vmatpush.msra.mxu0 %v61
  %464 = vmatpush.msra.mxu0 %v58
  %465 = vmatpush.msra.mxu0 %v55
  %466 = vmatpush.msra.mxu0 %v52
  %467 = vmatpush.msra.mxu0 %v49
  %468 = vmatpush.msra.mxu0 %v46
  %469 = vmatpush.msra.mxu0 %v43
  %470 = vmatpush.msra.mxu0 %v40
  %471 = vmatpush.msra.mxu0 %v37
  %472 = vmatpush.msra.mxu0 %v34
  %473 = vmatpush.msra.mxu0 %v31
  %474 = vmatpush.msra.mxu0 %v28
  %475 = vmatpush.msra.mxu0 %v25
  %476 = vmatmul.f32.gmra.mxu0 %v413
  %v477 = vpop.f32.mrf.mxu0
  %v478 = vadd.f32 0.0, %v477
  %479 = vdwg.mxu0
  %v480 = vadd.f32 %v417, %v438
  %v481 = vadd.f32 %v418, %v458
  %v482 = vxor.u32 %v480, 2147483648
  %v483 = vxor.u32 %v481, 2147483648
  %v484 = vmul.f32 %v482, 1.442695
  %v485 = vpow.pop %v484
  %v486 = vmul.f32 %v483, 1.442695
  %v487 = vpow.pop %v486
  %v488 = vadd.f32 %v485, 1.0
  %v489 = vadd.f32 %v487, 1.0
  %v490 = vrcp.pop %v488
  %v491 = vmul.f32 %v488, %v490
  %v492 = vsub.f32 1.0, %v491
  %v493 = vmul.f32 %v490, %v492
  %v494 = vadd.f32 %v490, %v493
  %vm495 = vweird.f32 %v488
  %vm496 = vweird.f32 %v490
  %vm497 = vmor %vm495, %vm496
  %v498 = vsel %vm497, %v490, %v494
  %v499 = vand.u32 2147483647, %v488
  %vm500 = vcmp.eq.f32.partialorder %v499, 8.507059e+37
  %v501 = vand.u32 %v488, 2147483648
  %v502 = vor.u32 1.1754944e-38, %v501
  %v503 = vsel %vm500, %v502, %v498
  %v504 = vmul.f32 1.0, %v503
  %v505 = vrcp.pop %v489
  %v506 = vmul.f32 %v489, %v505
  %v507 = vsub.f32 1.0, %v506
  %v508 = vmul.f32 %v505, %v507
  %v509 = vadd.f32 %v505, %v508
  %vm510 = vweird.f32 %v489
  %vm511 = vweird.f32 %v505
  %vm512 = vmor %vm510, %vm511
  %v513 = vsel %vm512, %v505, %v509
  %v514 = vand.u32 2147483647, %v489
  %vm515 = vcmp.eq.f32.partialorder %v514, 8.507059e+37
  %v516 = vand.u32 %v489, 2147483648
  %v517 = vor.u32 1.1754944e-38, %v516
  %v518 = vsel %vm515, %v517, %v513
  %v519 = vmul.f32 1.0, %v518
  %v520 = vadd.f32 %v478, %v177
  %v521 = vmul.f32 %v504, %v520
  %v522 = vadd.f32 %v419, %v521
  %v523 = vtanh.pop %v522
  %v524 = vsub.f32 1.0, %v519
  %v525 = vmul.f32 %v524, %v523
  %v526 = vmul.f32 %v519, %v413
  %v527 = vadd.f32 %v525, %v526
  %s528 = scalar_lea.vmem %s4, 24
  %529 = vst [vmem:[%s528] sm:$0xff] %v527
  %s530 = scalar_lea.vmem %s0, 96
  %v531 = vld [vmem:[%s530] sm:$0xff]
  %v532 = vld [vmem:[%s530 + $0x8] sm:$0xff]
  %v533 = vld [vmem:[%s530 + $0x10] sm:$0xff]
  %534 = vmatpush.msra.mxu0 %v68
  %535 = vmatpush.msra.mxu0 %v65
  %536 = vmatpush.msra.mxu0 %v62
  %537 = vmatpush.msra.mxu0 %v59
  %538 = vmatpush.msra.mxu0 %v56
  %539 = vmatpush.msra.mxu0 %v53
  %540 = vmatpush.msra.mxu0 %v50
  %541 = vmatpush.msra.mxu0 %v47
  %542 = vmatpush.msra.mxu0 %v44
  %543 = vmatpush.msra.mxu0 %v41
  %544 = vmatpush.msra.mxu0 %v38
  %545 = vmatpush.msra.mxu0 %v35
  %546 = vmatpush.msra.mxu0 %v32
  %547 = vmatpush.msra.mxu0 %v29
  %548 = vmatpush.msra.mxu0 %v26
  %549 = vmatpush.msra.mxu0 %v23
  %550 = vmatmul.f32.gmra.mxu0 %v527
  %v551 = vpop.f32.mrf.mxu0
  %v552 = vadd.f32 0.0, %v551
  %553 = vdwg.mxu0
  %554 = vmatpush.msra.mxu0 %v69
  %555 = vmatpush.msra.mxu0 %v66
  %556 = vmatpush.msra.mxu0 %v63
  %557 = vmatpush.msra.mxu0 %v60
  %558 = vmatpush.msra.mxu0 %v57
  %559 = vmatpush.msra.mxu0 %v54
  %560 = vmatpush.msra.mxu0 %v51
  %561 = vmatpush.msra.mxu0 %v48
  %562 = vmatpush.msra.mxu0 %v45
  %563 = vmatpush.msra.mxu0 %v42
  %564 = vmatpush.msra.mxu0 %v39
  %565 = vmatpush.msra.mxu0 %v36
  %566 = vmatpush.msra.mxu0 %v33
  %567 = vmatpush.msra.mxu0 %v30
  %568 = vmatpush.msra.mxu0 %v27
  %569 = vmatpush.msra.mxu0 %v24
  %570 = vmatmul.f32.gmra.mxu0 %v527
  %v571 = vpop.f32.mrf.mxu0
  %v572 = vadd.f32 0.0, %v571
  %573 = vdwg.mxu0
  %574 = vmatpush.msra.mxu0 %v70
  %575 = vmatpush.msra.mxu0 %v67
  %576 = vmatpush.msra.mxu0 %v64
  %577 = vmatpush.msra.mxu0 %v61
  %578 = vmatpush.msra.mxu0 %v58
  %579 = vmatpush.msra.mxu0 %v55
  %580 = vmatpush.msra.mxu0 %v52
  %581 = vmatpush.msra.mxu0 %v49
  %582 = vmatpush.msra.mxu0 %v46
  %583 = vmatpush.msra.mxu0 %v43
  %584 = vmatpush.msra.mxu0 %v40
  %585 = vmatpush.msra.mxu0 %v37
  %586 = vmatpush.msra.mxu0 %v34
  %587 = vmatpush.msra.mxu0 %v31
  %588 = vmatpush.msra.mxu0 %v28
  %589 = vmatpush.msra.mxu0 %v25
  %590 = vmatmul.f32.gmra.mxu0 %v527
  %v591 = vpop.f32.mrf.mxu0
  %v592 = vadd.f32 0.0, %v591
  %593 = vdwg.mxu0
  %v594 = vadd.f32 %v531, %v552
  %v595 = vadd.f32 %v532, %v572
  %v596 = vxor.u32 %v594, 2147483648
  %v597 = vxor.u32 %v595, 2147483648
  %v598 = vmul.f32 %v596, 1.442695
  %v599 = vpow.pop %v598
  %v600 = vmul.f32 %v597, 1.442695
  %v601 = vpow.pop %v600
  %v602 = vadd.f32 %v599, 1.0
  %v603 = vadd.f32 %v601, 1.0
  %v604 = vrcp.pop %v602
  %v605 = vmul.f32 %v602, %v604
  %v606 = vsub.f32 1.0, %v605
  %v607 = vmul.f32 %v604, %v606
  %v608 = vadd.f32 %v604, %v607
  %vm609 = vweird.f32 %v602
  %vm610 = vweird.f32 %v604
  %vm611 = vmor %vm609, %vm610
  %v612 = vsel %vm611, %v604, %v608
  %v613 = vand.u32 2147483647, %v602
  %vm614 = vcmp.eq.f32.partialorder %v613, 8.507059e+37
  %v615 = vand.u32 %v602, 2147483648
  %v616 = vor.u32 1.1754944e-38, %v615
  %v617 = vsel %vm614, %v616, %v612
  %v618 = vmul.f32 1.0, %v617
  %v619 = vrcp.pop %v603
  %v620 = vmul.f32 %v603, %v619
  %v621 = vsub.f32 1.0, %v620
  %v622 = vmul.f32 %v619, %v621
  %v623 = vadd.f32 %v619, %v622
  %vm624 = vweird.f32 %v603
  %vm625 = vweird.f32 %v619
  %vm626 = vmor %vm624, %vm625
  %v627 = vsel %vm626, %v619, %v623
  %v628 = vand.u32 2147483647, %v603
  %vm629 = vcmp.eq.f32.partialorder %v628, 8.507059e+37
  %v630 = vand.u32 %v603, 2147483648
  %v631 = vor.u32 1.1754944e-38, %v630
  %v632 = vsel %vm629, %v631, %v627
  %v633 = vmul.f32 1.0, %v632
  %v634 = vadd.f32 %v592, %v177
  %v635 = vmul.f32 %v618, %v634
  %v636 = vadd.f32 %v533, %v635
  %v637 = vtanh.pop %v636
  %v638 = vsub.f32 1.0, %v633
  %v639 = vmul.f32 %v638, %v637
  %v640 = vmul.f32 %v633, %v527
  %v641 = vadd.f32 %v639, %v640
  %s642 = scalar_lea.vmem %s4, 32
  %643 = vst [vmem:[%s642] sm:$0xff] %v641
  %s644 = scalar_lea.vmem %s0, 120
  %v645 = vld [vmem:[%s644] sm:$0xff]
  %v646 = vld [vmem:[%s644 + $0x8] sm:$0xff]
  %v647 = vld [vmem:[%s644 + $0x10] sm:$0xff]
  %648 = vmatpush.msra.mxu0 %v68
  %649 = vmatpush.msra.mxu0 %v65
  %650 = vmatpush.msra.mxu0 %v62
  %651 = vmatpush.msra.mxu0 %v59
  %652 = vmatpush.msra.mxu0 %v56
  %653 = vmatpush.msra.mxu0 %v53
  %654 = vmatpush.msra.mxu0 %v50
  %655 = vmatpush.msra.mxu0 %v47
  %656 = vmatpush.msra.mxu0 %v44
  %657 = vmatpush.msra.mxu0 %v41
  %658 = vmatpush.msra.mxu0 %v38
  %659 = vmatpush.msra.mxu0 %v35
  %660 = vmatpush.msra.mxu0 %v32
  %661 = vmatpush.msra.mxu0 %v29
  %662 = vmatpush.msra.mxu0 %v26
  %663 = vmatpush.msra.mxu0 %v23
  %664 = vmatmul.f32.gmra.mxu0 %v641
  %v665 = vpop.f32.mrf.mxu0
  %v666 = vadd.f32 0.0, %v665
  %667 = vdwg.mxu0
  %668 = vmatpush.msra.mxu0 %v69
  %669 = vmatpush.msra.mxu0 %v66
  %670 = vmatpush.msra.mxu0 %v63
  %671 = vmatpush.msra.mxu0 %v60
  %672 = vmatpush.msra.mxu0 %v57
  %673 = vmatpush.msra.mxu0 %v54
  %674 = vmatpush.msra.mxu0 %v51
  %675 = vmatpush.msra.mxu0 %v48
  %676 = vmatpush.msra.mxu0 %v45
  %677 = vmatpush.msra.mxu0 %v42
  %678 = vmatpush.msra.mxu0 %v39
  %679 = vmatpush.msra.mxu0 %v36
  %680 = vmatpush.msra.mxu0 %v33
  %681 = vmatpush.msra.mxu0 %v30
  %682 = vmatpush.msra.mxu0 %v27
  %683 = vmatpush.msra.mxu0 %v24
  %684 = vmatmul.f32.gmra.mxu0 %v641
  %v685 = vpop.f32.mrf.mxu0
  %v686 = vadd.f32 0.0, %v685
  %687 = vdwg.mxu0
  %688 = vmatpush.msra.mxu0 %v70
  %689 = vmatpush.msra.mxu0 %v67
  %690 = vmatpush.msra.mxu0 %v64
  %691 = vmatpush.msra.mxu0 %v61
  %692 = vmatpush.msra.mxu0 %v58
  %693 = vmatpush.msra.mxu0 %v55
  %694 = vmatpush.msra.mxu0 %v52
  %695 = vmatpush.msra.mxu0 %v49
  %696 = vmatpush.msra.mxu0 %v46
  %697 = vmatpush.msra.mxu0 %v43
  %698 = vmatpush.msra.mxu0 %v40
  %699 = vmatpush.msra.mxu0 %v37
  %700 = vmatpush.msra.mxu0 %v34
  %701 = vmatpush.msra.mxu0 %v31
  %702 = vmatpush.msra.mxu0 %v28
  %703 = vmatpush.msra.mxu0 %v25
  %704 = vmatmul.f32.gmra.mxu0 %v641
  %v705 = vpop.f32.mrf.mxu0
  %v706 = vadd.f32 0.0, %v705
  %707 = vdwg.mxu0
  %v708 = vadd.f32 %v645, %v666
  %v709 = vadd.f32 %v646, %v686
  %v710 = vxor.u32 %v708, 2147483648
  %v711 = vxor.u32 %v709, 2147483648
  %v712 = vmul.f32 %v710, 1.442695
  %v713 = vpow.pop %v712
  %v714 = vmul.f32 %v711, 1.442695
  %v715 = vpow.pop %v714
  %v716 = vadd.f32 %v713, 1.0
  %v717 = vadd.f32 %v715, 1.0
  %v718 = vrcp.pop %v716
  %v719 = vmul.f32 %v716, %v718
  %v720 = vsub.f32 1.0, %v719
  %v721 = vmul.f32 %v718, %v720
  %v722 = vadd.f32 %v718, %v721
  %vm723 = vweird.f32 %v716
  %vm724 = vweird.f32 %v718
  %vm725 = vmor %vm723, %vm724
  %v726 = vsel %vm725, %v718, %v722
  %v727 = vand.u32 2147483647, %v716
  %vm728 = vcmp.eq.f32.partialorder %v727, 8.507059e+37
  %v729 = vand.u32 %v716, 2147483648
  %v730 = vor.u32 1.1754944e-38, %v729
  %v731 = vsel %vm728, %v730, %v726
  %v732 = vmul.f32 1.0, %v731
  %v733 = vrcp.pop %v717
  %v734 = vmul.f32 %v717, %v733
  %v735 = vsub.f32 1.0, %v734
  %v736 = vmul.f32 %v733, %v735
  %v737 = vadd.f32 %v733, %v736
  %vm738 = vweird.f32 %v717
  %vm739 = vweird.f32 %v733
  %vm740 = vmor %vm738, %vm739
  %v741 = vsel %vm740, %v733, %v737
  %v742 = vand.u32 2147483647, %v717
  %vm743 = vcmp.eq.f32.partialorder %v742, 8.507059e+37
  %v744 = vand.u32 %v717, 2147483648
  %v745 = vor.u32 1.1754944e-38, %v744
  %v746 = vsel %vm743, %v745, %v741
  %v747 = vmul.f32 1.0, %v746
  %v748 = vadd.f32 %v706, %v177
  %v749 = vmul.f32 %v732, %v748
  %v750 = vadd.f32 %v647, %v749
  %v751 = vtanh.pop %v750
  %v752 = vsub.f32 1.0, %v747
  %v753 = vmul.f32 %v752, %v751
  %v754 = vmul.f32 %v747, %v641
  %v755 = vadd.f32 %v753, %v754
  %s756 = scalar_lea.vmem %s4, 40
  %757 = vst [vmem:[%s756] sm:$0xff] %v755
  %s758 = scalar_lea.vmem %s0, 144
  %v759 = vld [vmem:[%s758] sm:$0xff]
  %v760 = vld [vmem:[%s758 + $0x8] sm:$0xff]
  %v761 = vld [vmem:[%s758 + $0x10] sm:$0xff]
  %762 = vmatpush.msra.mxu0 %v68
  %763 = vmatpush.msra.mxu0 %v65
  %764 = vmatpush.msra.mxu0 %v62
  %765 = vmatpush.msra.mxu0 %v59
  %766 = vmatpush.msra.mxu0 %v56
  %767 = vmatpush.msra.mxu0 %v53
  %768 = vmatpush.msra.mxu0 %v50
  %769 = vmatpush.msra.mxu0 %v47
  %770 = vmatpush.msra.mxu0 %v44
  %771 = vmatpush.msra.mxu0 %v41
  %772 = vmatpush.msra.mxu0 %v38
  %773 = vmatpush.msra.mxu0 %v35
  %774 = vmatpush.msra.mxu0 %v32
  %775 = vmatpush.msra.mxu0 %v29
  %776 = vmatpush.msra.mxu0 %v26
  %777 = vmatpush.msra.mxu0 %v23
  %778 = vmatmul.f32.gmra.mxu0 %v755
  %v779 = vpop.f32.mrf.mxu0
  %v780 = vadd.f32 0.0, %v779
  %781 = vdwg.mxu0
  %782 = vmatpush.msra.mxu0 %v69
  %783 = vmatpush.msra.mxu0 %v66
  %784 = vmatpush.msra.mxu0 %v63
  %785 = vmatpush.msra.mxu0 %v60
  %786 = vmatpush.msra.mxu0 %v57
  %787 = vmatpush.msra.mxu0 %v54
  %788 = vmatpush.msra.mxu0 %v51
  %789 = vmatpush.msra.mxu0 %v48
  %790 = vmatpush.msra.mxu0 %v45
  %791 = vmatpush.msra.mxu0 %v42
  %792 = vmatpush.msra.mxu0 %v39
  %793 = vmatpush.msra.mxu0 %v36
  %794 = vmatpush.msra.mxu0 %v33
  %795 = vmatpush.msra.mxu0 %v30
  %796 = vmatpush.msra.mxu0 %v27
  %797 = vmatpush.msra.mxu0 %v24
  %798 = vmatmul.f32.gmra.mxu0 %v755
  %v799 = vpop.f32.mrf.mxu0
  %v800 = vadd.f32 0.0, %v799
  %801 = vdwg.mxu0
  %802 = vmatpush.msra.mxu0 %v70
  %803 = vmatpush.msra.mxu0 %v67
  %804 = vmatpush.msra.mxu0 %v64
  %805 = vmatpush.msra.mxu0 %v61
  %806 = vmatpush.msra.mxu0 %v58
  %807 = vmatpush.msra.mxu0 %v55
  %808 = vmatpush.msra.mxu0 %v52
  %809 = vmatpush.msra.mxu0 %v49
  %810 = vmatpush.msra.mxu0 %v46
  %811 = vmatpush.msra.mxu0 %v43
  %812 = vmatpush.msra.mxu0 %v40
  %813 = vmatpush.msra.mxu0 %v37
  %814 = vmatpush.msra.mxu0 %v34
  %815 = vmatpush.msra.mxu0 %v31
  %816 = vmatpush.msra.mxu0 %v28
  %817 = vmatpush.msra.mxu0 %v25
  %818 = vmatmul.f32.gmra.mxu0 %v755
  %v819 = vpop.f32.mrf.mxu0
  %v820 = vadd.f32 0.0, %v819
  %821 = vdwg.mxu0
  %v822 = vadd.f32 %v759, %v780
  %v823 = vadd.f32 %v760, %v800
  %v824 = vxor.u32 %v822, 2147483648
  %v825 = vxor.u32 %v823, 2147483648
  %v826 = vmul.f32 %v824, 1.442695
  %v827 = vpow.pop %v826
  %v828 = vmul.f32 %v825, 1.442695
  %v829 = vpow.pop %v828
  %v830 = vadd.f32 %v827, 1.0
  %v831 = vadd.f32 %v829, 1.0
  %v832 = vrcp.pop %v830
  %v833 = vmul.f32 %v830, %v832
  %v834 = vsub.f32 1.0, %v833
  %v835 = vmul.f32 %v832, %v834
  %v836 = vadd.f32 %v832, %v835
  %vm837 = vweird.f32 %v830
  %vm838 = vweird.f32 %v832
  %vm839 = vmor %vm837, %vm838
  %v840 = vsel %vm839, %v832, %v836
  %v841 = vand.u32 2147483647, %v830
  %vm842 = vcmp.eq.f32.partialorder %v841, 8.507059e+37
  %v843 = vand.u32 %v830, 2147483648
  %v844 = vor.u32 1.1754944e-38, %v843
  %v845 = vsel %vm842, %v844, %v840
  %v846 = vmul.f32 1.0, %v845
  %v847 = vrcp.pop %v831
  %v848 = vmul.f32 %v831, %v847
  %v849 = vsub.f32 1.0, %v848
  %v850 = vmul.f32 %v847, %v849
  %v851 = vadd.f32 %v847, %v850
  %vm852 = vweird.f32 %v831
  %vm853 = vweird.f32 %v847
  %vm854 = vmor %vm852, %vm853
  %v855 = vsel %vm854, %v847, %v851
  %v856 = vand.u32 2147483647, %v831
  %vm857 = vcmp.eq.f32.partialorder %v856, 8.507059e+37
  %v858 = vand.u32 %v831, 2147483648
  %v859 = vor.u32 1.1754944e-38, %v858
  %v860 = vsel %vm857, %v859, %v855
  %v861 = vmul.f32 1.0, %v860
  %v862 = vadd.f32 %v820, %v177
  %v863 = vmul.f32 %v846, %v862
  %v864 = vadd.f32 %v761, %v863
  %v865 = vtanh.pop %v864
  %v866 = vsub.f32 1.0, %v861
  %v867 = vmul.f32 %v866, %v865
  %v868 = vmul.f32 %v861, %v755
  %v869 = vadd.f32 %v867, %v868
  %s870 = scalar_lea.vmem %s4, 48
  %871 = vst [vmem:[%s870] sm:$0xff] %v869
  %s872 = scalar_lea.vmem %s0, 168
  %v873 = vld [vmem:[%s872] sm:$0xff]
  %v874 = vld [vmem:[%s872 + $0x8] sm:$0xff]
  %v875 = vld [vmem:[%s872 + $0x10] sm:$0xff]
  %876 = vmatpush.msra.mxu0 %v68
  %877 = vmatpush.msra.mxu0 %v65
  %878 = vmatpush.msra.mxu0 %v62
  %879 = vmatpush.msra.mxu0 %v59
  %880 = vmatpush.msra.mxu0 %v56
  %881 = vmatpush.msra.mxu0 %v53
  %882 = vmatpush.msra.mxu0 %v50
  %883 = vmatpush.msra.mxu0 %v47
  %884 = vmatpush.msra.mxu0 %v44
  %885 = vmatpush.msra.mxu0 %v41
  %886 = vmatpush.msra.mxu0 %v38
  %887 = vmatpush.msra.mxu0 %v35
  %888 = vmatpush.msra.mxu0 %v32
  %889 = vmatpush.msra.mxu0 %v29
  %890 = vmatpush.msra.mxu0 %v26
  %891 = vmatpush.msra.mxu0 %v23
  %892 = vmatmul.f32.gmra.mxu0 %v869
  %v893 = vpop.f32.mrf.mxu0
  %v894 = vadd.f32 0.0, %v893
  %895 = vdwg.mxu0
  %896 = vmatpush.msra.mxu0 %v69
  %897 = vmatpush.msra.mxu0 %v66
  %898 = vmatpush.msra.mxu0 %v63
  %899 = vmatpush.msra.mxu0 %v60
  %900 = vmatpush.msra.mxu0 %v57
  %901 = vmatpush.msra.mxu0 %v54
  %902 = vmatpush.msra.mxu0 %v51
  %903 = vmatpush.msra.mxu0 %v48
  %904 = vmatpush.msra.mxu0 %v45
  %905 = vmatpush.msra.mxu0 %v42
  %906 = vmatpush.msra.mxu0 %v39
  %907 = vmatpush.msra.mxu0 %v36
  %908 = vmatpush.msra.mxu0 %v33
  %909 = vmatpush.msra.mxu0 %v30
  %910 = vmatpush.msra.mxu0 %v27
  %911 = vmatpush.msra.mxu0 %v24
  %912 = vmatmul.f32.gmra.mxu0 %v869
  %v913 = vpop.f32.mrf.mxu0
  %v914 = vadd.f32 0.0, %v913
  %915 = vdwg.mxu0
  %916 = vmatpush.msra.mxu0 %v70
  %917 = vmatpush.msra.mxu0 %v67
  %918 = vmatpush.msra.mxu0 %v64
  %919 = vmatpush.msra.mxu0 %v61
  %920 = vmatpush.msra.mxu0 %v58
  %921 = vmatpush.msra.mxu0 %v55
  %922 = vmatpush.msra.mxu0 %v52
  %923 = vmatpush.msra.mxu0 %v49
  %924 = vmatpush.msra.mxu0 %v46
  %925 = vmatpush.msra.mxu0 %v43
  %926 = vmatpush.msra.mxu0 %v40
  %927 = vmatpush.msra.mxu0 %v37
  %928 = vmatpush.msra.mxu0 %v34
  %929 = vmatpush.msra.mxu0 %v31
  %930 = vmatpush.msra.mxu0 %v28
  %931 = vmatpush.msra.mxu0 %v25
  %932 = vmatmul.f32.gmra.mxu0 %v869
  %v933 = vpop.f32.mrf.mxu0
  %v934 = vadd.f32 0.0, %v933
  %935 = vdwg.mxu0
  %v936 = vadd.f32 %v873, %v894
  %v937 = vadd.f32 %v874, %v914
  %v938 = vxor.u32 %v936, 2147483648
  %v939 = vxor.u32 %v937, 2147483648
  %v940 = vmul.f32 %v938, 1.442695
  %v941 = vpow.pop %v940
  %v942 = vmul.f32 %v939, 1.442695
  %v943 = vpow.pop %v942
  %v944 = vadd.f32 %v941, 1.0
  %v945 = vadd.f32 %v943, 1.0
  %v946 = vrcp.pop %v944
  %v947 = vmul.f32 %v944, %v946
  %v948 = vsub.f32 1.0, %v947
  %v949 = vmul.f32 %v946, %v948
  %v950 = vadd.f32 %v946, %v949
  %vm951 = vweird.f32 %v944
  %vm952 = vweird.f32 %v946
  %vm953 = vmor %vm951, %vm952
  %v954 = vsel %vm953, %v946, %v950
  %v955 = vand.u32 2147483647, %v944
  %vm956 = vcmp.eq.f32.partialorder %v955, 8.507059e+37
  %v957 = vand.u32 %v944, 2147483648
  %v958 = vor.u32 1.1754944e-38, %v957
  %v959 = vsel %vm956, %v958, %v954
  %v960 = vmul.f32 1.0, %v959
  %v961 = vrcp.pop %v945
  %v962 = vmul.f32 %v945, %v961
  %v963 = vsub.f32 1.0, %v962
  %v964 = vmul.f32 %v961, %v963
  %v965 = vadd.f32 %v961, %v964
  %vm966 = vweird.f32 %v945
  %vm967 = vweird.f32 %v961
  %vm968 = vmor %vm966, %vm967
  %v969 = vsel %vm968, %v961, %v965
  %v970 = vand.u32 2147483647, %v945
  %vm971 = vcmp.eq.f32.partialorder %v970, 8.507059e+37
  %v972 = vand.u32 %v945, 2147483648
  %v973 = vor.u32 1.1754944e-38, %v972
  %v974 = vsel %vm971, %v973, %v969
  %v975 = vmul.f32 1.0, %v974
  %v976 = vadd.f32 %v934, %v177
  %v977 = vmul.f32 %v960, %v976
  %v978 = vadd.f32 %v875, %v977
  %v979 = vtanh.pop %v978
  %v980 = vsub.f32 1.0, %v975
  %v981 = vmul.f32 %v980, %v979
  %v982 = vmul.f32 %v975, %v869
  %v983 = vadd.f32 %v981, %v982
  %s984 = scalar_lea.vmem %s4, 56
  %985 = vst [vmem:[%s984] sm:$0xff] %v983
  %986 = vst [vmem:[#allocation2] sm:$0xff] %v983
  // Predicated region
  $region22: #{gru_sequence.2} parent=0 // pred_check
    _
  $region23: #{gru_sequence.2} parent=0 // pred_check_branch
    %988 = sbr.rel (0) target = $region25
  $region24: #{gru_sequence.2} parent=0 // pred_region
    _
  $region25: #{gru_sequence.2} parent=0 // pred_fallthru
    _
  // Predicated region
  $region26: #{gru_sequence.2} parent=0 // pred_check
    _
  $region27: #{gru_sequence.2} parent=0 // pred_check_branch
    %990 = sbr.rel (0) target = $region29
  $region28: #{gru_sequence.2} parent=0 // pred_region
    _
  $region29: #{gru_sequence.2} parent=0 // pred_fallthru
    _

</llo_original>
